<compile_context>
chip_gen: v7x
topology: tpu7x:2x2x1
jax: 0.10.0
libtpu: 0.0.40
codegen_flags: <defaults>
</compile_context>

<pallas_src>
import math
import jax
import jax.numpy as jnp
from jax import lax
from jax.experimental import pallas as pl
from jax.experimental.pallas import tpu as pltpu


def spec_dyn_conv_kernel(xe_ref, wa_ref, ba_ref, wb_ref, wt_ref, bm_ref, o_ref):
    # xe_ref : (Bb, C, 3, Hp, W*c_out) pre-shifted + lane-replicated padded input
    # wa_ref : (C, C)  routing conv "a" middle temporal tap, laid out [in, out]
    # ba_ref : (1, C)  routing conv "a" bias
    # wb_ref : (C, C)  routing conv "b" middle temporal tap, laid out [out, in]
    # wt_ref : (C*9, W*c_out) main conv weights; row ci*9 + dh*3 + dw holds
    #                         W[:, ci, dh, dw] tiled W times across lanes
    # bm_ref : (1, W*c_out)   main conv bias tiled W times across lanes
    # o_ref  : (Bb, H, W*c_out) lane-dense output slab
    Bb, C = xe_ref.shape[0], xe_ref.shape[1]
    H, Wco = o_ref.shape[1], o_ref.shape[2]
    inv_pool = 1.0 / (H * Wco)          # == 1 / (H * W * c_out)

    for bi in range(Bb):                # trace-time; Bb=1 on v7x, Bb=B on v5e/v6e
        # ---- RouteFuncMLP (VPU/XLU only; off the conv critical path) -------
        # AdaptiveAvgPool2d(1): rows 1..H of the dw=1 window are exactly the
        # unpadded image replicated c_out times along lanes.
        h1_pre = None
        for ci in range(C):
            img = xe_ref[bi, ci, 1, 1:1 + H, :]                        # (H, Wco)
            s = jnp.sum(jnp.sum(img, axis=1, keepdims=True),
                        axis=0, keepdims=True) * inv_pool              # (1, 1)
            t = s * wa_ref[ci:ci + 1, :]                               # (1, C)
            h1_pre = t if h1_pre is None else h1_pre + t
        h1 = jnp.maximum(h1_pre + ba_ref[...], 0.0)                    # (1, C)
        alpha = jnp.sum(wb_ref[...] * h1, axis=1, keepdims=True) + 1.0  # (C, 1)

        # ---- SpecAdaConv2d (cal_dim='cin'): 9*C aligned-tap FMAs on the VPU.
        # Per-ci unscaled partial sums; alpha applied once at the end so the
        # tap FMAs never wait on the routing reductions.
        acc = None
        for ci in range(C):
            acc_ci = None
            for dh in range(3):
                for dw in range(3):
                    tap = xe_ref[bi, ci, dw, dh:dh + H, :]             # (H, Wco)
                    r = ci * 9 + dh * 3 + dw
                    term = tap * wt_ref[r:r + 1, :]                    # row bcast
                    acc_ci = term if acc_ci is None else acc_ci + term
            contrib = acc_ci * alpha[ci:ci + 1, 0:1]
            acc = contrib if acc is None else acc + contrib
        o_ref[bi] = (acc + bm_ref[...]).astype(o_ref.dtype)


def _default_batch_block(B):
    """v7x (2 TCs/chip): keep grid=(B,) parallel. Single-TC v5e/v6e: merge B."""
    try:
        kind = jax.devices()[0].device_kind.lower()
    except Exception:
        kind = ""
    if ("v7" in kind or "7x" in kind) and B >= 2:
        return 1
    return B


def spec_dyn_conv(x_nchw, params, *, batch_block=None, nchw_out=True):
    """Forward pass of SpecDynConv. x_nchw: (B, C_in, H, W) float32 (NCHW)."""
    a_w, a_b, b_w, w, b = (params["a_w"], params["a_b"], params["b_w"],
                           params["w"], params["b"])
    B, C, H, W = x_nchw.shape
    c_out = w.shape[1]
    Hp = H + 2
    Wco = W * c_out

    if batch_block is None:
        batch_block = _default_batch_block(B)
    if B % batch_block != 0:
        batch_block = 1
    nsteps = B // batch_block

    # ---- wrapper-side layout plumbing (pure data movement, no math) --------
    xp = jnp.pad(x_nchw, ((0, 0), (0, 0), (1, 1), (1, 1)))          # (B,C,Hp,Wp)
    xw = jnp.stack([xp[..., dw:dw + W] for dw in range(3)], axis=2)  # (B,C,3,Hp,W)
    xe = jnp.repeat(xw, c_out, axis=4)                               # (B,C,3,Hp,Wco)
    # routing convs: only the middle temporal tap of the [3,1] kernels matters
    wa_t = jnp.transpose(a_w[:, :, 1, 0])                            # (in, out)
    ba = a_b.reshape(1, C)
    wb = b_w[:, :, 1, 0]                                             # (out, in)
    # main conv: row ci*9 + dh*3 + dw holds W[:, ci, dh, dw], tiled W times
    wt = jnp.transpose(w[0], (1, 2, 3, 0)).reshape(C * 9, c_out)
    wt_tiled = jnp.tile(wt, (1, W))                                  # (C*9, Wco)
    bm_tiled = jnp.tile(b.reshape(1, c_out), (1, W))                 # (1, Wco)

    out_slab = pl.pallas_call(
        spec_dyn_conv_kernel,
        out_shape=jax.ShapeDtypeStruct((B, H, Wco), jnp.float32),
        grid_spec=pltpu.PrefetchScalarGridSpec(
            num_scalar_prefetch=0,
            grid=(nsteps,),
            in_specs=[
                pl.BlockSpec((batch_block, C, 3, Hp, Wco),
                             lambda i: (i, 0, 0, 0, 0)),
                pl.BlockSpec((C, C), lambda i: (0, 0)),
                pl.BlockSpec((1, C), lambda i: (0, 0)),
                pl.BlockSpec((C, C), lambda i: (0, 0)),
                pl.BlockSpec((C * 9, Wco), lambda i: (0, 0)),
                pl.BlockSpec((1, Wco), lambda i: (0, 0)),
            ],
            out_specs=pl.BlockSpec((batch_block, H, Wco),
                                   lambda i: (i, 0, 0)),
        ),
        compiler_params=pltpu.CompilerParams(
            dimension_semantics=("parallel",),
            vmem_limit_bytes=32 * 1024 * 1024),
    )(xe, wa_t, ba, wb, wt_tiled, bm_tiled)

    if not nchw_out:
        return out_slab.reshape(B, H, W, c_out)          # NHWc slab, no transpose
    return jnp.transpose(out_slab.reshape(B, H, W, c_out), (0, 3, 1, 2))


def init_params(key, c_in, c_out):
    """Deterministic params matching the PyTorch module's parameter shapes.

    NOTE: PyTorch zero-inits RouteFuncMLP.b (so alpha == 1 at init); a small
    nonzero deterministic init is used here so the calibration path is
    actually exercised.  Parity tests against the real module must zero it.
    """
    k = jax.random.split(key, 5)
    a_w = jax.random.normal(k[0], (c_in, c_in, 3, 1), jnp.float32) / math.sqrt(3 * c_in)
    a_b = jax.random.normal(k[1], (c_in,), jnp.float32) * 0.1
    b_w = jax.random.normal(k[2], (c_in, c_in, 3, 1), jnp.float32) * 0.05
    w = jax.random.normal(k[3], (1, c_out, c_in, 3, 3), jnp.float32) / math.sqrt(9 * c_in)
    b = jax.random.normal(k[4], (1, c_out), jnp.float32) * 0.1
    return {"a_w": a_w, "a_b": a_b, "b_w": b_w, "w": w, "b": b}


def ref_forward(x_nchw, params):
    """Pure-JAX reference reproducing the PyTorch forward semantics."""
    a_w, a_b, b_w, w, b = (params["a_w"], params["a_b"], params["b_w"],
                           params["w"], params["b"])
    pooled = jnp.mean(x_nchw, axis=(2, 3))                      # AdaptiveAvgPool2d(1)
    A = a_w[:, :, 1, 0]                                         # (out, in)
    Bm = b_w[:, :, 1, 0]                                        # (out, in)
    h1 = jnp.maximum(pooled @ A.T + a_b[None, :], 0.0)
    alpha = h1 @ Bm.T + 1.0                                     # (B, C_in)
    xs = x_nchw * alpha[:, :, None, None]                       # == conv(x, alpha*W)
    y = lax.conv_general_dilated(
        xs, w[0], window_strides=(1, 1), padding=((1, 1), (1, 1)),
        dimension_numbers=("NCHW", "OIHW", "NCHW"))
    return y + b.reshape(1, -1, 1, 1)


if __name__ == "__main__":
    key = jax.random.PRNGKey(0)
    kp, kx = jax.random.split(key)
    B, C_in, C_out, H, W = 2, 4, 8, 16, 16          # W * C_out == 128 (lane-dense)
    params = init_params(kp, C_in, C_out)
    x = jax.random.normal(kx, (B, C_in, H, W), jnp.float32)

    out = spec_dyn_conv(x, params)
    out = jax.block_until_ready(out)

    ref = ref_forward(x, params)
    assert out.shape == (B, C_out, H, W), out.shape
    err = float(jnp.max(jnp.abs(out - ref)))
    assert err < 1e-4, f"max abs err {err}"
    print("KERNEL_OK")
</pallas_src>

<mosaic_0001>
module attributes {stable_mosaic.version = 11 : i64} {
  func.func @spec_dyn_conv_kernel(%arg0: i32, %arg1: memref<2x4x3x18x128xf32, #tpu.memory_space<vmem>>, %arg2: memref<4x4xf32, #tpu.memory_space<vmem>>, %arg3: memref<1x4xf32, #tpu.memory_space<vmem>>, %arg4: memref<4x4xf32, #tpu.memory_space<vmem>>, %arg5: memref<36x128xf32, #tpu.memory_space<vmem>>, %arg6: memref<1x128xf32, #tpu.memory_space<vmem>>, %arg7: memref<2x16x128xf32, #tpu.memory_space<vmem>>) attributes {dimension_semantics = [#tpu.dimension_semantics<parallel>], iteration_bounds = array<i64: 1>, scalar_prefetch = 0 : i64, scratch_operands = 0 : i64, tpu.core_type = #tpu.core_type<tc>, window_params = [{transform_indices = @transform_0, window_bounds = array<i64: 2, 4, 3, 18, 128>}, {pipeline_mode = #tpu.pipeline_mode<synchronous>, transform_indices = @transform_1, window_bounds = array<i64: 4, 4>}, {pipeline_mode = #tpu.pipeline_mode<synchronous>, transform_indices = @transform_2, window_bounds = array<i64: 1, 4>}, {pipeline_mode = #tpu.pipeline_mode<synchronous>, transform_indices = @transform_3, window_bounds = array<i64: 4, 4>}, {pipeline_mode = #tpu.pipeline_mode<synchronous>, transform_indices = @transform_4, window_bounds = array<i64: 36, 128>}, {pipeline_mode = #tpu.pipeline_mode<synchronous>, transform_indices = @transform_5, window_bounds = array<i64: 1, 128>}, {transform_indices = @transform_6, window_bounds = array<i64: 2, 16, 128>}]} {
    %c0 = arith.constant 0 : index
    %c0_0 = arith.constant 0 : index
    %c1 = arith.constant 1 : index
    %c1_1 = arith.constant 1 : index
    %c0_2 = arith.constant 0 : index
    %0 = vector.load %arg1[%c0, %c0_0, %c1, %c1_1, %c0_2] : memref<2x4x3x18x128xf32, #tpu.memory_space<vmem>>, vector<1x1x1x16x128xf32>
    %1 = vector.shape_cast %0 : vector<1x1x1x16x128xf32> to vector<16x128xf32>
    %cst = arith.constant dense<0.000000e+00> : vector<16xf32>
    %2 = vector.multi_reduction <add>, %1, %cst [1] : vector<16x128xf32> to vector<16xf32>
    %3 = vector.shape_cast %2 : vector<16xf32> to vector<16x1xf32>
    %cst_3 = arith.constant dense<0.000000e+00> : vector<1xf32>
    %4 = vector.multi_reduction <add>, %3, %cst_3 [0] : vector<16x1xf32> to vector<1xf32>
    %5 = vector.shape_cast %4 : vector<1xf32> to vector<1x1xf32>
    %cst_4 = arith.constant 4.8828125E-4 : f32
    %6 = vector.broadcast %cst_4 : f32 to vector<1x1xf32>
    %7 = arith.mulf %5, %6 : vector<1x1xf32>
    %c0_5 = arith.constant 0 : index
    %c0_6 = arith.constant 0 : index
    %8 = vector.load %arg2[%c0_5, %c0_6] : memref<4x4xf32, #tpu.memory_space<vmem>>, vector<1x4xf32>
    %9 = vector.broadcast %7 : vector<1x1xf32> to vector<1x4xf32>
    %10 = arith.mulf %9, %8 : vector<1x4xf32>
    %c0_7 = arith.constant 0 : index
    %c1_8 = arith.constant 1 : index
    %c1_9 = arith.constant 1 : index
    %c1_10 = arith.constant 1 : index
    %c0_11 = arith.constant 0 : index
    %11 = vector.load %arg1[%c0_7, %c1_8, %c1_9, %c1_10, %c0_11] : memref<2x4x3x18x128xf32, #tpu.memory_space<vmem>>, vector<1x1x1x16x128xf32>
    %12 = vector.shape_cast %11 : vector<1x1x1x16x128xf32> to vector<16x128xf32>
    %cst_12 = arith.constant dense<0.000000e+00> : vector<16xf32>
    %13 = vector.multi_reduction <add>, %12, %cst_12 [1] : vector<16x128xf32> to vector<16xf32>
    %14 = vector.shape_cast %13 : vector<16xf32> to vector<16x1xf32>
    %cst_13 = arith.constant dense<0.000000e+00> : vector<1xf32>
    %15 = vector.multi_reduction <add>, %14, %cst_13 [0] : vector<16x1xf32> to vector<1xf32>
    %16 = vector.shape_cast %15 : vector<1xf32> to vector<1x1xf32>
    %cst_14 = arith.constant 4.8828125E-4 : f32
    %17 = vector.broadcast %cst_14 : f32 to vector<1x1xf32>
    %18 = arith.mulf %16, %17 : vector<1x1xf32>
    %c1_15 = arith.constant 1 : index
    %c0_16 = arith.constant 0 : index
    %19 = vector.load %arg2[%c1_15, %c0_16] : memref<4x4xf32, #tpu.memory_space<vmem>>, vector<1x4xf32>
    %20 = vector.broadcast %18 : vector<1x1xf32> to vector<1x4xf32>
    %21 = arith.mulf %20, %19 : vector<1x4xf32>
    %22 = arith.addf %10, %21 : vector<1x4xf32>
    %c0_17 = arith.constant 0 : index
    %c2 = arith.constant 2 : index
    %c1_18 = arith.constant 1 : index
    %c1_19 = arith.constant 1 : index
    %c0_20 = arith.constant 0 : index
    %23 = vector.load %arg1[%c0_17, %c2, %c1_18, %c1_19, %c0_20] : memref<2x4x3x18x128xf32, #tpu.memory_space<vmem>>, vector<1x1x1x16x128xf32>
    %24 = vector.shape_cast %23 : vector<1x1x1x16x128xf32> to vector<16x128xf32>
    %cst_21 = arith.constant dense<0.000000e+00> : vector<16xf32>
    %25 = vector.multi_reduction <add>, %24, %cst_21 [1] : vector<16x128xf32> to vector<16xf32>
    %26 = vector.shape_cast %25 : vector<16xf32> to vector<16x1xf32>
    %cst_22 = arith.constant dense<0.000000e+00> : vector<1xf32>
    %27 = vector.multi_reduction <add>, %26, %cst_22 [0] : vector<16x1xf32> to vector<1xf32>
    %28 = vector.shape_cast %27 : vector<1xf32> to vector<1x1xf32>
    %cst_23 = arith.constant 4.8828125E-4 : f32
    %29 = vector.broadcast %cst_23 : f32 to vector<1x1xf32>
    %30 = arith.mulf %28, %29 : vector<1x1xf32>
    %c2_24 = arith.constant 2 : index
    %c0_25 = arith.constant 0 : index
    %31 = vector.load %arg2[%c2_24, %c0_25] : memref<4x4xf32, #tpu.memory_space<vmem>>, vector<1x4xf32>
    %32 = vector.broadcast %30 : vector<1x1xf32> to vector<1x4xf32>
    %33 = arith.mulf %32, %31 : vector<1x4xf32>
    %34 = arith.addf %22, %33 : vector<1x4xf32>
    %c0_26 = arith.constant 0 : index
    %c3 = arith.constant 3 : index
    %c1_27 = arith.constant 1 : index
    %c1_28 = arith.constant 1 : index
    %c0_29 = arith.constant 0 : index
    %35 = vector.load %arg1[%c0_26, %c3, %c1_27, %c1_28, %c0_29] : memref<2x4x3x18x128xf32, #tpu.memory_space<vmem>>, vector<1x1x1x16x128xf32>
    %36 = vector.shape_cast %35 : vector<1x1x1x16x128xf32> to vector<16x128xf32>
    %cst_30 = arith.constant dense<0.000000e+00> : vector<16xf32>
    %37 = vector.multi_reduction <add>, %36, %cst_30 [1] : vector<16x128xf32> to vector<16xf32>
    %38 = vector.shape_cast %37 : vector<16xf32> to vector<16x1xf32>
    %cst_31 = arith.constant dense<0.000000e+00> : vector<1xf32>
    %39 = vector.multi_reduction <add>, %38, %cst_31 [0] : vector<16x1xf32> to vector<1xf32>
    %40 = vector.shape_cast %39 : vector<1xf32> to vector<1x1xf32>
    %cst_32 = arith.constant 4.8828125E-4 : f32
    %41 = vector.broadcast %cst_32 : f32 to vector<1x1xf32>
    %42 = arith.mulf %40, %41 : vector<1x1xf32>
    %c3_33 = arith.constant 3 : index
    %c0_34 = arith.constant 0 : index
    %43 = vector.load %arg2[%c3_33, %c0_34] : memref<4x4xf32, #tpu.memory_space<vmem>>, vector<1x4xf32>
    %44 = vector.broadcast %42 : vector<1x1xf32> to vector<1x4xf32>
    %45 = arith.mulf %44, %43 : vector<1x4xf32>
    %46 = arith.addf %34, %45 : vector<1x4xf32>
    %c0_35 = arith.constant 0 : index
    %c0_36 = arith.constant 0 : index
    %47 = vector.load %arg3[%c0_35, %c0_36] : memref<1x4xf32, #tpu.memory_space<vmem>>, vector<1x4xf32>
    %48 = arith.addf %46, %47 : vector<1x4xf32>
    %cst_37 = arith.constant 0.000000e+00 : f32
    %49 = vector.broadcast %cst_37 : f32 to vector<1x4xf32>
    %50 = arith.maximumf %48, %49 : vector<1x4xf32>
    %c0_38 = arith.constant 0 : index
    %c0_39 = arith.constant 0 : index
    %51 = vector.load %arg4[%c0_38, %c0_39] : memref<4x4xf32, #tpu.memory_space<vmem>>, vector<4x4xf32>
    %52 = vector.broadcast %50 : vector<1x4xf32> to vector<4x4xf32>
    %53 = arith.mulf %51, %52 : vector<4x4xf32>
    %cst_40 = arith.constant dense<0.000000e+00> : vector<4xf32>
    %54 = vector.multi_reduction <add>, %53, %cst_40 [1] : vector<4x4xf32> to vector<4xf32>
    %55 = vector.shape_cast %54 : vector<4xf32> to vector<4x1xf32>
    %cst_41 = arith.constant 1.000000e+00 : f32
    %56 = vector.broadcast %cst_41 : f32 to vector<4x1xf32>
    %57 = arith.addf %55, %56 : vector<4x1xf32>
    %c0_42 = arith.constant 0 : index
    %c0_43 = arith.constant 0 : index
    %c0_44 = arith.constant 0 : index
    %c0_45 = arith.constant 0 : index
    %c0_46 = arith.constant 0 : index
    %58 = vector.load %arg1[%c0_42, %c0_43, %c0_44, %c0_45, %c0_46] : memref<2x4x3x18x128xf32, #tpu.memory_space<vmem>>, vector<1x1x1x16x128xf32>
    %59 = vector.shape_cast %58 : vector<1x1x1x16x128xf32> to vector<16x128xf32>
    %c0_47 = arith.constant 0 : index
    %c0_48 = arith.constant 0 : index
    %60 = vector.load %arg5[%c0_47, %c0_48] : memref<36x128xf32, #tpu.memory_space<vmem>>, vector<1x128xf32>
    %61 = vector.broadcast %60 : vector<1x128xf32> to vector<16x128xf32>
    %62 = arith.mulf %59, %61 : vector<16x128xf32>
    %c0_49 = arith.constant 0 : index
    %c0_50 = arith.constant 0 : index
    %c1_51 = arith.constant 1 : index
    %c0_52 = arith.constant 0 : index
    %c0_53 = arith.constant 0 : index
    %63 = vector.load %arg1[%c0_49, %c0_50, %c1_51, %c0_52, %c0_53] : memref<2x4x3x18x128xf32, #tpu.memory_space<vmem>>, vector<1x1x1x16x128xf32>
    %64 = vector.shape_cast %63 : vector<1x1x1x16x128xf32> to vector<16x128xf32>
    %c1_54 = arith.constant 1 : index
    %c0_55 = arith.constant 0 : index
    %65 = vector.load %arg5[%c1_54, %c0_55] : memref<36x128xf32, #tpu.memory_space<vmem>>, vector<1x128xf32>
    %66 = vector.broadcast %65 : vector<1x128xf32> to vector<16x128xf32>
    %67 = arith.mulf %64, %66 : vector<16x128xf32>
    %68 = arith.addf %62, %67 : vector<16x128xf32>
    %c0_56 = arith.constant 0 : index
    %c0_57 = arith.constant 0 : index
    %c2_58 = arith.constant 2 : index
    %c0_59 = arith.constant 0 : index
    %c0_60 = arith.constant 0 : index
    %69 = vector.load %arg1[%c0_56, %c0_57, %c2_58, %c0_59, %c0_60] : memref<2x4x3x18x128xf32, #tpu.memory_space<vmem>>, vector<1x1x1x16x128xf32>
    %70 = vector.shape_cast %69 : vector<1x1x1x16x128xf32> to vector<16x128xf32>
    %c2_61 = arith.constant 2 : index
    %c0_62 = arith.constant 0 : index
    %71 = vector.load %arg5[%c2_61, %c0_62] : memref<36x128xf32, #tpu.memory_space<vmem>>, vector<1x128xf32>
    %72 = vector.broadcast %71 : vector<1x128xf32> to vector<16x128xf32>
    %73 = arith.mulf %70, %72 : vector<16x128xf32>
    %74 = arith.addf %68, %73 : vector<16x128xf32>
    %c0_63 = arith.constant 0 : index
    %c0_64 = arith.constant 0 : index
    %c0_65 = arith.constant 0 : index
    %c1_66 = arith.constant 1 : index
    %c0_67 = arith.constant 0 : index
    %75 = vector.load %arg1[%c0_63, %c0_64, %c0_65, %c1_66, %c0_67] : memref<2x4x3x18x128xf32, #tpu.memory_space<vmem>>, vector<1x1x1x16x128xf32>
    %76 = vector.shape_cast %75 : vector<1x1x1x16x128xf32> to vector<16x128xf32>
    %c3_68 = arith.constant 3 : index
    %c0_69 = arith.constant 0 : index
    %77 = vector.load %arg5[%c3_68, %c0_69] : memref<36x128xf32, #tpu.memory_space<vmem>>, vector<1x128xf32>
    %78 = vector.broadcast %77 : vector<1x128xf32> to vector<16x128xf32>
    %79 = arith.mulf %76, %78 : vector<16x128xf32>
    %80 = arith.addf %74, %79 : vector<16x128xf32>
    %c0_70 = arith.constant 0 : index
    %c0_71 = arith.constant 0 : index
    %c1_72 = arith.constant 1 : index
    %c1_73 = arith.constant 1 : index
    %c0_74 = arith.constant 0 : index
    %81 = vector.load %arg1[%c0_70, %c0_71, %c1_72, %c1_73, %c0_74] : memref<2x4x3x18x128xf32, #tpu.memory_space<vmem>>, vector<1x1x1x16x128xf32>
    %82 = vector.shape_cast %81 : vector<1x1x1x16x128xf32> to vector<16x128xf32>
    %c4 = arith.constant 4 : index
    %c0_75 = arith.constant 0 : index
    %83 = vector.load %arg5[%c4, %c0_75] : memref<36x128xf32, #tpu.memory_space<vmem>>, vector<1x128xf32>
    %84 = vector.broadcast %83 : vector<1x128xf32> to vector<16x128xf32>
    %85 = arith.mulf %82, %84 : vector<16x128xf32>
    %86 = arith.addf %80, %85 : vector<16x128xf32>
    %c0_76 = arith.constant 0 : index
    %c0_77 = arith.constant 0 : index
    %c2_78 = arith.constant 2 : index
    %c1_79 = arith.constant 1 : index
    %c0_80 = arith.constant 0 : index
    %87 = vector.load %arg1[%c0_76, %c0_77, %c2_78, %c1_79, %c0_80] : memref<2x4x3x18x128xf32, #tpu.memory_space<vmem>>, vector<1x1x1x16x128xf32>
    %88 = vector.shape_cast %87 : vector<1x1x1x16x128xf32> to vector<16x128xf32>
    %c5 = arith.constant 5 : index
    %c0_81 = arith.constant 0 : index
    %89 = vector.load %arg5[%c5, %c0_81] : memref<36x128xf32, #tpu.memory_space<vmem>>, vector<1x128xf32>
    %90 = vector.broadcast %89 : vector<1x128xf32> to vector<16x128xf32>
    %91 = arith.mulf %88, %90 : vector<16x128xf32>
    %92 = arith.addf %86, %91 : vector<16x128xf32>
    %c0_82 = arith.constant 0 : index
    %c0_83 = arith.constant 0 : index
    %c0_84 = arith.constant 0 : index
    %c2_85 = arith.constant 2 : index
    %c0_86 = arith.constant 0 : index
    %93 = vector.load %arg1[%c0_82, %c0_83, %c0_84, %c2_85, %c0_86] : memref<2x4x3x18x128xf32, #tpu.memory_space<vmem>>, vector<1x1x1x16x128xf32>
    %94 = vector.shape_cast %93 : vector<1x1x1x16x128xf32> to vector<16x128xf32>
    %c6 = arith.constant 6 : index
    %c0_87 = arith.constant 0 : index
    %95 = vector.load %arg5[%c6, %c0_87] : memref<36x128xf32, #tpu.memory_space<vmem>>, vector<1x128xf32>
    %96 = vector.broadcast %95 : vector<1x128xf32> to vector<16x128xf32>
    %97 = arith.mulf %94, %96 : vector<16x128xf32>
    %98 = arith.addf %92, %97 : vector<16x128xf32>
    %c0_88 = arith.constant 0 : index
    %c0_89 = arith.constant 0 : index
    %c1_90 = arith.constant 1 : index
    %c2_91 = arith.constant 2 : index
    %c0_92 = arith.constant 0 : index
    %99 = vector.load %arg1[%c0_88, %c0_89, %c1_90, %c2_91, %c0_92] : memref<2x4x3x18x128xf32, #tpu.memory_space<vmem>>, vector<1x1x1x16x128xf32>
    %100 = vector.shape_cast %99 : vector<1x1x1x16x128xf32> to vector<16x128xf32>
    %c7 = arith.constant 7 : index
    %c0_93 = arith.constant 0 : index
    %101 = vector.load %arg5[%c7, %c0_93] : memref<36x128xf32, #tpu.memory_space<vmem>>, vector<1x128xf32>
    %102 = vector.broadcast %101 : vector<1x128xf32> to vector<16x128xf32>
    %103 = arith.mulf %100, %102 : vector<16x128xf32>
    %104 = arith.addf %98, %103 : vector<16x128xf32>
    %c0_94 = arith.constant 0 : index
    %c0_95 = arith.constant 0 : index
    %c2_96 = arith.constant 2 : index
    %c2_97 = arith.constant 2 : index
    %c0_98 = arith.constant 0 : index
    %105 = vector.load %arg1[%c0_94, %c0_95, %c2_96, %c2_97, %c0_98] : memref<2x4x3x18x128xf32, #tpu.memory_space<vmem>>, vector<1x1x1x16x128xf32>
    %106 = vector.shape_cast %105 : vector<1x1x1x16x128xf32> to vector<16x128xf32>
    %c8 = arith.constant 8 : index
    %c0_99 = arith.constant 0 : index
    %107 = vector.load %arg5[%c8, %c0_99] : memref<36x128xf32, #tpu.memory_space<vmem>>, vector<1x128xf32>
    %108 = vector.broadcast %107 : vector<1x128xf32> to vector<16x128xf32>
    %109 = arith.mulf %106, %108 : vector<16x128xf32>
    %110 = arith.addf %104, %109 : vector<16x128xf32>
    %111 = vector.extract_strided_slice %57 {offsets = [0, 0], sizes = [1, 1], strides = [1, 1]} : vector<4x1xf32> to vector<1x1xf32>
    %112 = vector.broadcast %111 : vector<1x1xf32> to vector<16x128xf32>
    %113 = arith.mulf %110, %112 : vector<16x128xf32>
    %c0_100 = arith.constant 0 : index
    %c1_101 = arith.constant 1 : index
    %c0_102 = arith.constant 0 : index
    %c0_103 = arith.constant 0 : index
    %c0_104 = arith.constant 0 : index
    %114 = vector.load %arg1[%c0_100, %c1_101, %c0_102, %c0_103, %c0_104] : memref<2x4x3x18x128xf32, #tpu.memory_space<vmem>>, vector<1x1x1x16x128xf32>
    %115 = vector.shape_cast %114 : vector<1x1x1x16x128xf32> to vector<16x128xf32>
    %c9 = arith.constant 9 : index
    %c0_105 = arith.constant 0 : index
    %116 = vector.load %arg5[%c9, %c0_105] : memref<36x128xf32, #tpu.memory_space<vmem>>, vector<1x128xf32>
    %117 = vector.broadcast %116 : vector<1x128xf32> to vector<16x128xf32>
    %118 = arith.mulf %115, %117 : vector<16x128xf32>
    %c0_106 = arith.constant 0 : index
    %c1_107 = arith.constant 1 : index
    %c1_108 = arith.constant 1 : index
    %c0_109 = arith.constant 0 : index
    %c0_110 = arith.constant 0 : index
    %119 = vector.load %arg1[%c0_106, %c1_107, %c1_108, %c0_109, %c0_110] : memref<2x4x3x18x128xf32, #tpu.memory_space<vmem>>, vector<1x1x1x16x128xf32>
    %120 = vector.shape_cast %119 : vector<1x1x1x16x128xf32> to vector<16x128xf32>
    %c10 = arith.constant 10 : index
    %c0_111 = arith.constant 0 : index
    %121 = vector.load %arg5[%c10, %c0_111] : memref<36x128xf32, #tpu.memory_space<vmem>>, vector<1x128xf32>
    %122 = vector.broadcast %121 : vector<1x128xf32> to vector<16x128xf32>
    %123 = arith.mulf %120, %122 : vector<16x128xf32>
    %124 = arith.addf %118, %123 : vector<16x128xf32>
    %c0_112 = arith.constant 0 : index
    %c1_113 = arith.constant 1 : index
    %c2_114 = arith.constant 2 : index
    %c0_115 = arith.constant 0 : index
    %c0_116 = arith.constant 0 : index
    %125 = vector.load %arg1[%c0_112, %c1_113, %c2_114, %c0_115, %c0_116] : memref<2x4x3x18x128xf32, #tpu.memory_space<vmem>>, vector<1x1x1x16x128xf32>
    %126 = vector.shape_cast %125 : vector<1x1x1x16x128xf32> to vector<16x128xf32>
    %c11 = arith.constant 11 : index
    %c0_117 = arith.constant 0 : index
    %127 = vector.load %arg5[%c11, %c0_117] : memref<36x128xf32, #tpu.memory_space<vmem>>, vector<1x128xf32>
    %128 = vector.broadcast %127 : vector<1x128xf32> to vector<16x128xf32>
    %129 = arith.mulf %126, %128 : vector<16x128xf32>
    %130 = arith.addf %124, %129 : vector<16x128xf32>
    %c0_118 = arith.constant 0 : index
    %c1_119 = arith.constant 1 : index
    %c0_120 = arith.constant 0 : index
    %c1_121 = arith.constant 1 : index
    %c0_122 = arith.constant 0 : index
    %131 = vector.load %arg1[%c0_118, %c1_119, %c0_120, %c1_121, %c0_122] : memref<2x4x3x18x128xf32, #tpu.memory_space<vmem>>, vector<1x1x1x16x128xf32>
    %132 = vector.shape_cast %131 : vector<1x1x1x16x128xf32> to vector<16x128xf32>
    %c12 = arith.constant 12 : index
    %c0_123 = arith.constant 0 : index
    %133 = vector.load %arg5[%c12, %c0_123] : memref<36x128xf32, #tpu.memory_space<vmem>>, vector<1x128xf32>
    %134 = vector.broadcast %133 : vector<1x128xf32> to vector<16x128xf32>
    %135 = arith.mulf %132, %134 : vector<16x128xf32>
    %136 = arith.addf %130, %135 : vector<16x128xf32>
    %c0_124 = arith.constant 0 : index
    %c1_125 = arith.constant 1 : index
    %c1_126 = arith.constant 1 : index
    %c1_127 = arith.constant 1 : index
    %c0_128 = arith.constant 0 : index
    %137 = vector.load %arg1[%c0_124, %c1_125, %c1_126, %c1_127, %c0_128] : memref<2x4x3x18x128xf32, #tpu.memory_space<vmem>>, vector<1x1x1x16x128xf32>
    %138 = vector.shape_cast %137 : vector<1x1x1x16x128xf32> to vector<16x128xf32>
    %c13 = arith.constant 13 : index
    %c0_129 = arith.constant 0 : index
    %139 = vector.load %arg5[%c13, %c0_129] : memref<36x128xf32, #tpu.memory_space<vmem>>, vector<1x128xf32>
    %140 = vector.broadcast %139 : vector<1x128xf32> to vector<16x128xf32>
    %141 = arith.mulf %138, %140 : vector<16x128xf32>
    %142 = arith.addf %136, %141 : vector<16x128xf32>
    %c0_130 = arith.constant 0 : index
    %c1_131 = arith.constant 1 : index
    %c2_132 = arith.constant 2 : index
    %c1_133 = arith.constant 1 : index
    %c0_134 = arith.constant 0 : index
    %143 = vector.load %arg1[%c0_130, %c1_131, %c2_132, %c1_133, %c0_134] : memref<2x4x3x18x128xf32, #tpu.memory_space<vmem>>, vector<1x1x1x16x128xf32>
    %144 = vector.shape_cast %143 : vector<1x1x1x16x128xf32> to vector<16x128xf32>
    %c14 = arith.constant 14 : index
    %c0_135 = arith.constant 0 : index
    %145 = vector.load %arg5[%c14, %c0_135] : memref<36x128xf32, #tpu.memory_space<vmem>>, vector<1x128xf32>
    %146 = vector.broadcast %145 : vector<1x128xf32> to vector<16x128xf32>
    %147 = arith.mulf %144, %146 : vector<16x128xf32>
    %148 = arith.addf %142, %147 : vector<16x128xf32>
    %c0_136 = arith.constant 0 : index
    %c1_137 = arith.constant 1 : index
    %c0_138 = arith.constant 0 : index
    %c2_139 = arith.constant 2 : index
    %c0_140 = arith.constant 0 : index
    %149 = vector.load %arg1[%c0_136, %c1_137, %c0_138, %c2_139, %c0_140] : memref<2x4x3x18x128xf32, #tpu.memory_space<vmem>>, vector<1x1x1x16x128xf32>
    %150 = vector.shape_cast %149 : vector<1x1x1x16x128xf32> to vector<16x128xf32>
    %c15 = arith.constant 15 : index
    %c0_141 = arith.constant 0 : index
    %151 = vector.load %arg5[%c15, %c0_141] : memref<36x128xf32, #tpu.memory_space<vmem>>, vector<1x128xf32>
    %152 = vector.broadcast %151 : vector<1x128xf32> to vector<16x128xf32>
    %153 = arith.mulf %150, %152 : vector<16x128xf32>
    %154 = arith.addf %148, %153 : vector<16x128xf32>
    %c0_142 = arith.constant 0 : index
    %c1_143 = arith.constant 1 : index
    %c1_144 = arith.constant 1 : index
    %c2_145 = arith.constant 2 : index
    %c0_146 = arith.constant 0 : index
    %155 = vector.load %arg1[%c0_142, %c1_143, %c1_144, %c2_145, %c0_146] : memref<2x4x3x18x128xf32, #tpu.memory_space<vmem>>, vector<1x1x1x16x128xf32>
    %156 = vector.shape_cast %155 : vector<1x1x1x16x128xf32> to vector<16x128xf32>
    %c16 = arith.constant 16 : index
    %c0_147 = arith.constant 0 : index
    %157 = vector.load %arg5[%c16, %c0_147] : memref<36x128xf32, #tpu.memory_space<vmem>>, vector<1x128xf32>
    %158 = vector.broadcast %157 : vector<1x128xf32> to vector<16x128xf32>
    %159 = arith.mulf %156, %158 : vector<16x128xf32>
    %160 = arith.addf %154, %159 : vector<16x128xf32>
    %c0_148 = arith.constant 0 : index
    %c1_149 = arith.constant 1 : index
    %c2_150 = arith.constant 2 : index
    %c2_151 = arith.constant 2 : index
    %c0_152 = arith.constant 0 : index
    %161 = vector.load %arg1[%c0_148, %c1_149, %c2_150, %c2_151, %c0_152] : memref<2x4x3x18x128xf32, #tpu.memory_space<vmem>>, vector<1x1x1x16x128xf32>
    %162 = vector.shape_cast %161 : vector<1x1x1x16x128xf32> to vector<16x128xf32>
    %c17 = arith.constant 17 : index
    %c0_153 = arith.constant 0 : index
    %163 = vector.load %arg5[%c17, %c0_153] : memref<36x128xf32, #tpu.memory_space<vmem>>, vector<1x128xf32>
    %164 = vector.broadcast %163 : vector<1x128xf32> to vector<16x128xf32>
    %165 = arith.mulf %162, %164 : vector<16x128xf32>
    %166 = arith.addf %160, %165 : vector<16x128xf32>
    %167 = vector.extract_strided_slice %57 {offsets = [1, 0], sizes = [1, 1], strides = [1, 1]} : vector<4x1xf32> to vector<1x1xf32>
    %168 = vector.broadcast %167 : vector<1x1xf32> to vector<16x128xf32>
    %169 = arith.mulf %166, %168 : vector<16x128xf32>
    %170 = arith.addf %113, %169 : vector<16x128xf32>
    %c0_154 = arith.constant 0 : index
    %c2_155 = arith.constant 2 : index
    %c0_156 = arith.constant 0 : index
    %c0_157 = arith.constant 0 : index
    %c0_158 = arith.constant 0 : index
    %171 = vector.load %arg1[%c0_154, %c2_155, %c0_156, %c0_157, %c0_158] : memref<2x4x3x18x128xf32, #tpu.memory_space<vmem>>, vector<1x1x1x16x128xf32>
    %172 = vector.shape_cast %171 : vector<1x1x1x16x128xf32> to vector<16x128xf32>
    %c18 = arith.constant 18 : index
    %c0_159 = arith.constant 0 : index
    %173 = vector.load %arg5[%c18, %c0_159] : memref<36x128xf32, #tpu.memory_space<vmem>>, vector<1x128xf32>
    %174 = vector.broadcast %173 : vector<1x128xf32> to vector<16x128xf32>
    %175 = arith.mulf %172, %174 : vector<16x128xf32>
    %c0_160 = arith.constant 0 : index
    %c2_161 = arith.constant 2 : index
    %c1_162 = arith.constant 1 : index
    %c0_163 = arith.constant 0 : index
    %c0_164 = arith.constant 0 : index
    %176 = vector.load %arg1[%c0_160, %c2_161, %c1_162, %c0_163, %c0_164] : memref<2x4x3x18x128xf32, #tpu.memory_space<vmem>>, vector<1x1x1x16x128xf32>
    %177 = vector.shape_cast %176 : vector<1x1x1x16x128xf32> to vector<16x128xf32>
    %c19 = arith.constant 19 : index
    %c0_165 = arith.constant 0 : index
    %178 = vector.load %arg5[%c19, %c0_165] : memref<36x128xf32, #tpu.memory_space<vmem>>, vector<1x128xf32>
    %179 = vector.broadcast %178 : vector<1x128xf32> to vector<16x128xf32>
    %180 = arith.mulf %177, %179 : vector<16x128xf32>
    %181 = arith.addf %175, %180 : vector<16x128xf32>
    %c0_166 = arith.constant 0 : index
    %c2_167 = arith.constant 2 : index
    %c2_168 = arith.constant 2 : index
    %c0_169 = arith.constant 0 : index
    %c0_170 = arith.constant 0 : index
    %182 = vector.load %arg1[%c0_166, %c2_167, %c2_168, %c0_169, %c0_170] : memref<2x4x3x18x128xf32, #tpu.memory_space<vmem>>, vector<1x1x1x16x128xf32>
    %183 = vector.shape_cast %182 : vector<1x1x1x16x128xf32> to vector<16x128xf32>
    %c20 = arith.constant 20 : index
    %c0_171 = arith.constant 0 : index
    %184 = vector.load %arg5[%c20, %c0_171] : memref<36x128xf32, #tpu.memory_space<vmem>>, vector<1x128xf32>
    %185 = vector.broadcast %184 : vector<1x128xf32> to vector<16x128xf32>
    %186 = arith.mulf %183, %185 : vector<16x128xf32>
    %187 = arith.addf %181, %186 : vector<16x128xf32>
    %c0_172 = arith.constant 0 : index
    %c2_173 = arith.constant 2 : index
    %c0_174 = arith.constant 0 : index
    %c1_175 = arith.constant 1 : index
    %c0_176 = arith.constant 0 : index
    %188 = vector.load %arg1[%c0_172, %c2_173, %c0_174, %c1_175, %c0_176] : memref<2x4x3x18x128xf32, #tpu.memory_space<vmem>>, vector<1x1x1x16x128xf32>
    %189 = vector.shape_cast %188 : vector<1x1x1x16x128xf32> to vector<16x128xf32>
    %c21 = arith.constant 21 : index
    %c0_177 = arith.constant 0 : index
    %190 = vector.load %arg5[%c21, %c0_177] : memref<36x128xf32, #tpu.memory_space<vmem>>, vector<1x128xf32>
    %191 = vector.broadcast %190 : vector<1x128xf32> to vector<16x128xf32>
    %192 = arith.mulf %189, %191 : vector<16x128xf32>
    %193 = arith.addf %187, %192 : vector<16x128xf32>
    %c0_178 = arith.constant 0 : index
    %c2_179 = arith.constant 2 : index
    %c1_180 = arith.constant 1 : index
    %c1_181 = arith.constant 1 : index
    %c0_182 = arith.constant 0 : index
    %194 = vector.load %arg1[%c0_178, %c2_179, %c1_180, %c1_181, %c0_182] : memref<2x4x3x18x128xf32, #tpu.memory_space<vmem>>, vector<1x1x1x16x128xf32>
    %195 = vector.shape_cast %194 : vector<1x1x1x16x128xf32> to vector<16x128xf32>
    %c22 = arith.constant 22 : index
    %c0_183 = arith.constant 0 : index
    %196 = vector.load %arg5[%c22, %c0_183] : memref<36x128xf32, #tpu.memory_space<vmem>>, vector<1x128xf32>
    %197 = vector.broadcast %196 : vector<1x128xf32> to vector<16x128xf32>
    %198 = arith.mulf %195, %197 : vector<16x128xf32>
    %199 = arith.addf %193, %198 : vector<16x128xf32>
    %c0_184 = arith.constant 0 : index
    %c2_185 = arith.constant 2 : index
    %c2_186 = arith.constant 2 : index
    %c1_187 = arith.constant 1 : index
    %c0_188 = arith.constant 0 : index
    %200 = vector.load %arg1[%c0_184, %c2_185, %c2_186, %c1_187, %c0_188] : memref<2x4x3x18x128xf32, #tpu.memory_space<vmem>>, vector<1x1x1x16x128xf32>
    %201 = vector.shape_cast %200 : vector<1x1x1x16x128xf32> to vector<16x128xf32>
    %c23 = arith.constant 23 : index
    %c0_189 = arith.constant 0 : index
    %202 = vector.load %arg5[%c23, %c0_189] : memref<36x128xf32, #tpu.memory_space<vmem>>, vector<1x128xf32>
    %203 = vector.broadcast %202 : vector<1x128xf32> to vector<16x128xf32>
    %204 = arith.mulf %201, %203 : vector<16x128xf32>
    %205 = arith.addf %199, %204 : vector<16x128xf32>
    %c0_190 = arith.constant 0 : index
    %c2_191 = arith.constant 2 : index
    %c0_192 = arith.constant 0 : index
    %c2_193 = arith.constant 2 : index
    %c0_194 = arith.constant 0 : index
    %206 = vector.load %arg1[%c0_190, %c2_191, %c0_192, %c2_193, %c0_194] : memref<2x4x3x18x128xf32, #tpu.memory_space<vmem>>, vector<1x1x1x16x128xf32>
    %207 = vector.shape_cast %206 : vector<1x1x1x16x128xf32> to vector<16x128xf32>
    %c24 = arith.constant 24 : index
    %c0_195 = arith.constant 0 : index
    %208 = vector.load %arg5[%c24, %c0_195] : memref<36x128xf32, #tpu.memory_space<vmem>>, vector<1x128xf32>
    %209 = vector.broadcast %208 : vector<1x128xf32> to vector<16x128xf32>
    %210 = arith.mulf %207, %209 : vector<16x128xf32>
    %211 = arith.addf %205, %210 : vector<16x128xf32>
    %c0_196 = arith.constant 0 : index
    %c2_197 = arith.constant 2 : index
    %c1_198 = arith.constant 1 : index
    %c2_199 = arith.constant 2 : index
    %c0_200 = arith.constant 0 : index
    %212 = vector.load %arg1[%c0_196, %c2_197, %c1_198, %c2_199, %c0_200] : memref<2x4x3x18x128xf32, #tpu.memory_space<vmem>>, vector<1x1x1x16x128xf32>
    %213 = vector.shape_cast %212 : vector<1x1x1x16x128xf32> to vector<16x128xf32>
    %c25 = arith.constant 25 : index
    %c0_201 = arith.constant 0 : index
    %214 = vector.load %arg5[%c25, %c0_201] : memref<36x128xf32, #tpu.memory_space<vmem>>, vector<1x128xf32>
    %215 = vector.broadcast %214 : vector<1x128xf32> to vector<16x128xf32>
    %216 = arith.mulf %213, %215 : vector<16x128xf32>
    %217 = arith.addf %211, %216 : vector<16x128xf32>
    %c0_202 = arith.constant 0 : index
    %c2_203 = arith.constant 2 : index
    %c2_204 = arith.constant 2 : index
    %c2_205 = arith.constant 2 : index
    %c0_206 = arith.constant 0 : index
    %218 = vector.load %arg1[%c0_202, %c2_203, %c2_204, %c2_205, %c0_206] : memref<2x4x3x18x128xf32, #tpu.memory_space<vmem>>, vector<1x1x1x16x128xf32>
    %219 = vector.shape_cast %218 : vector<1x1x1x16x128xf32> to vector<16x128xf32>
    %c26 = arith.constant 26 : index
    %c0_207 = arith.constant 0 : index
    %220 = vector.load %arg5[%c26, %c0_207] : memref<36x128xf32, #tpu.memory_space<vmem>>, vector<1x128xf32>
    %221 = vector.broadcast %220 : vector<1x128xf32> to vector<16x128xf32>
    %222 = arith.mulf %219, %221 : vector<16x128xf32>
    %223 = arith.addf %217, %222 : vector<16x128xf32>
    %224 = vector.extract_strided_slice %57 {offsets = [2, 0], sizes = [1, 1], strides = [1, 1]} : vector<4x1xf32> to vector<1x1xf32>
    %225 = vector.broadcast %224 : vector<1x1xf32> to vector<16x128xf32>
    %226 = arith.mulf %223, %225 : vector<16x128xf32>
    %227 = arith.addf %170, %226 : vector<16x128xf32>
    %c0_208 = arith.constant 0 : index
    %c3_209 = arith.constant 3 : index
    %c0_210 = arith.constant 0 : index
    %c0_211 = arith.constant 0 : index
    %c0_212 = arith.constant 0 : index
    %228 = vector.load %arg1[%c0_208, %c3_209, %c0_210, %c0_211, %c0_212] : memref<2x4x3x18x128xf32, #tpu.memory_space<vmem>>, vector<1x1x1x16x128xf32>
    %229 = vector.shape_cast %228 : vector<1x1x1x16x128xf32> to vector<16x128xf32>
    %c27 = arith.constant 27 : index
    %c0_213 = arith.constant 0 : index
    %230 = vector.load %arg5[%c27, %c0_213] : memref<36x128xf32, #tpu.memory_space<vmem>>, vector<1x128xf32>
    %231 = vector.broadcast %230 : vector<1x128xf32> to vector<16x128xf32>
    %232 = arith.mulf %229, %231 : vector<16x128xf32>
    %c0_214 = arith.constant 0 : index
    %c3_215 = arith.constant 3 : index
    %c1_216 = arith.constant 1 : index
    %c0_217 = arith.constant 0 : index
    %c0_218 = arith.constant 0 : index
    %233 = vector.load %arg1[%c0_214, %c3_215, %c1_216, %c0_217, %c0_218] : memref<2x4x3x18x128xf32, #tpu.memory_space<vmem>>, vector<1x1x1x16x128xf32>
    %234 = vector.shape_cast %233 : vector<1x1x1x16x128xf32> to vector<16x128xf32>
    %c28 = arith.constant 28 : index
    %c0_219 = arith.constant 0 : index
    %235 = vector.load %arg5[%c28, %c0_219] : memref<36x128xf32, #tpu.memory_space<vmem>>, vector<1x128xf32>
    %236 = vector.broadcast %235 : vector<1x128xf32> to vector<16x128xf32>
    %237 = arith.mulf %234, %236 : vector<16x128xf32>
    %238 = arith.addf %232, %237 : vector<16x128xf32>
    %c0_220 = arith.constant 0 : index
    %c3_221 = arith.constant 3 : index
    %c2_222 = arith.constant 2 : index
    %c0_223 = arith.constant 0 : index
    %c0_224 = arith.constant 0 : index
    %239 = vector.load %arg1[%c0_220, %c3_221, %c2_222, %c0_223, %c0_224] : memref<2x4x3x18x128xf32, #tpu.memory_space<vmem>>, vector<1x1x1x16x128xf32>
    %240 = vector.shape_cast %239 : vector<1x1x1x16x128xf32> to vector<16x128xf32>
    %c29 = arith.constant 29 : index
    %c0_225 = arith.constant 0 : index
    %241 = vector.load %arg5[%c29, %c0_225] : memref<36x128xf32, #tpu.memory_space<vmem>>, vector<1x128xf32>
    %242 = vector.broadcast %241 : vector<1x128xf32> to vector<16x128xf32>
    %243 = arith.mulf %240, %242 : vector<16x128xf32>
    %244 = arith.addf %238, %243 : vector<16x128xf32>
    %c0_226 = arith.constant 0 : index
    %c3_227 = arith.constant 3 : index
    %c0_228 = arith.constant 0 : index
    %c1_229 = arith.constant 1 : index
    %c0_230 = arith.constant 0 : index
    %245 = vector.load %arg1[%c0_226, %c3_227, %c0_228, %c1_229, %c0_230] : memref<2x4x3x18x128xf32, #tpu.memory_space<vmem>>, vector<1x1x1x16x128xf32>
    %246 = vector.shape_cast %245 : vector<1x1x1x16x128xf32> to vector<16x128xf32>
    %c30 = arith.constant 30 : index
    %c0_231 = arith.constant 0 : index
    %247 = vector.load %arg5[%c30, %c0_231] : memref<36x128xf32, #tpu.memory_space<vmem>>, vector<1x128xf32>
    %248 = vector.broadcast %247 : vector<1x128xf32> to vector<16x128xf32>
    %249 = arith.mulf %246, %248 : vector<16x128xf32>
    %250 = arith.addf %244, %249 : vector<16x128xf32>
    %c0_232 = arith.constant 0 : index
    %c3_233 = arith.constant 3 : index
    %c1_234 = arith.constant 1 : index
    %c1_235 = arith.constant 1 : index
    %c0_236 = arith.constant 0 : index
    %251 = vector.load %arg1[%c0_232, %c3_233, %c1_234, %c1_235, %c0_236] : memref<2x4x3x18x128xf32, #tpu.memory_space<vmem>>, vector<1x1x1x16x128xf32>
    %252 = vector.shape_cast %251 : vector<1x1x1x16x128xf32> to vector<16x128xf32>
    %c31 = arith.constant 31 : index
    %c0_237 = arith.constant 0 : index
    %253 = vector.load %arg5[%c31, %c0_237] : memref<36x128xf32, #tpu.memory_space<vmem>>, vector<1x128xf32>
    %254 = vector.broadcast %253 : vector<1x128xf32> to vector<16x128xf32>
    %255 = arith.mulf %252, %254 : vector<16x128xf32>
    %256 = arith.addf %250, %255 : vector<16x128xf32>
    %c0_238 = arith.constant 0 : index
    %c3_239 = arith.constant 3 : index
    %c2_240 = arith.constant 2 : index
    %c1_241 = arith.constant 1 : index
    %c0_242 = arith.constant 0 : index
    %257 = vector.load %arg1[%c0_238, %c3_239, %c2_240, %c1_241, %c0_242] : memref<2x4x3x18x128xf32, #tpu.memory_space<vmem>>, vector<1x1x1x16x128xf32>
    %258 = vector.shape_cast %257 : vector<1x1x1x16x128xf32> to vector<16x128xf32>
    %c32 = arith.constant 32 : index
    %c0_243 = arith.constant 0 : index
    %259 = vector.load %arg5[%c32, %c0_243] : memref<36x128xf32, #tpu.memory_space<vmem>>, vector<1x128xf32>
    %260 = vector.broadcast %259 : vector<1x128xf32> to vector<16x128xf32>
    %261 = arith.mulf %258, %260 : vector<16x128xf32>
    %262 = arith.addf %256, %261 : vector<16x128xf32>
    %c0_244 = arith.constant 0 : index
    %c3_245 = arith.constant 3 : index
    %c0_246 = arith.constant 0 : index
    %c2_247 = arith.constant 2 : index
    %c0_248 = arith.constant 0 : index
    %263 = vector.load %arg1[%c0_244, %c3_245, %c0_246, %c2_247, %c0_248] : memref<2x4x3x18x128xf32, #tpu.memory_space<vmem>>, vector<1x1x1x16x128xf32>
    %264 = vector.shape_cast %263 : vector<1x1x1x16x128xf32> to vector<16x128xf32>
    %c33 = arith.constant 33 : index
    %c0_249 = arith.constant 0 : index
    %265 = vector.load %arg5[%c33, %c0_249] : memref<36x128xf32, #tpu.memory_space<vmem>>, vector<1x128xf32>
    %266 = vector.broadcast %265 : vector<1x128xf32> to vector<16x128xf32>
    %267 = arith.mulf %264, %266 : vector<16x128xf32>
    %268 = arith.addf %262, %267 : vector<16x128xf32>
    %c0_250 = arith.constant 0 : index
    %c3_251 = arith.constant 3 : index
    %c1_252 = arith.constant 1 : index
    %c2_253 = arith.constant 2 : index
    %c0_254 = arith.constant 0 : index
    %269 = vector.load %arg1[%c0_250, %c3_251, %c1_252, %c2_253, %c0_254] : memref<2x4x3x18x128xf32, #tpu.memory_space<vmem>>, vector<1x1x1x16x128xf32>
    %270 = vector.shape_cast %269 : vector<1x1x1x16x128xf32> to vector<16x128xf32>
    %c34 = arith.constant 34 : index
    %c0_255 = arith.constant 0 : index
    %271 = vector.load %arg5[%c34, %c0_255] : memref<36x128xf32, #tpu.memory_space<vmem>>, vector<1x128xf32>
    %272 = vector.broadcast %271 : vector<1x128xf32> to vector<16x128xf32>
    %273 = arith.mulf %270, %272 : vector<16x128xf32>
    %274 = arith.addf %268, %273 : vector<16x128xf32>
    %c0_256 = arith.constant 0 : index
    %c3_257 = arith.constant 3 : index
    %c2_258 = arith.constant 2 : index
    %c2_259 = arith.constant 2 : index
    %c0_260 = arith.constant 0 : index
    %275 = vector.load %arg1[%c0_256, %c3_257, %c2_258, %c2_259, %c0_260] : memref<2x4x3x18x128xf32, #tpu.memory_space<vmem>>, vector<1x1x1x16x128xf32>
    %276 = vector.shape_cast %275 : vector<1x1x1x16x128xf32> to vector<16x128xf32>
    %c35 = arith.constant 35 : index
    %c0_261 = arith.constant 0 : index
    %277 = vector.load %arg5[%c35, %c0_261] : memref<36x128xf32, #tpu.memory_space<vmem>>, vector<1x128xf32>
    %278 = vector.broadcast %277 : vector<1x128xf32> to vector<16x128xf32>
    %279 = arith.mulf %276, %278 : vector<16x128xf32>
    %280 = arith.addf %274, %279 : vector<16x128xf32>
    %281 = vector.extract_strided_slice %57 {offsets = [3, 0], sizes = [1, 1], strides = [1, 1]} : vector<4x1xf32> to vector<1x1xf32>
    %282 = vector.broadcast %281 : vector<1x1xf32> to vector<16x128xf32>
    %283 = arith.mulf %280, %282 : vector<16x128xf32>
    %284 = arith.addf %227, %283 : vector<16x128xf32>
    %c0_262 = arith.constant 0 : index
    %c0_263 = arith.constant 0 : index
    %285 = vector.load %arg6[%c0_262, %c0_263] : memref<1x128xf32, #tpu.memory_space<vmem>>, vector<1x128xf32>
    %286 = vector.broadcast %285 : vector<1x128xf32> to vector<16x128xf32>
    %287 = arith.addf %284, %286 : vector<16x128xf32>
    %c0_264 = arith.constant 0 : index
    %c0_265 = arith.constant 0 : index
    %c0_266 = arith.constant 0 : index
    %288 = vector.load %arg7[%c0_264, %c0_265, %c0_266] : memref<2x16x128xf32, #tpu.memory_space<vmem>>, vector<1x16x128xf32>
    %289 = vector.shape_cast %288 : vector<1x16x128xf32> to vector<16x128xf32>
    %290 = vector.shape_cast %287 : vector<16x128xf32> to vector<1x16x128xf32>
    tpu.vector_store %arg7[%c0_264, %c0_265, %c0_266], %290 {strides = array<i32>} : memref<2x16x128xf32, #tpu.memory_space<vmem>>, vector<1x16x128xf32>,
    %c1_267 = arith.constant 1 : index
    %c0_268 = arith.constant 0 : index
    %c1_269 = arith.constant 1 : index
    %c1_270 = arith.constant 1 : index
    %c0_271 = arith.constant 0 : index
    %291 = vector.load %arg1[%c1_267, %c0_268, %c1_269, %c1_270, %c0_271] : memref<2x4x3x18x128xf32, #tpu.memory_space<vmem>>, vector<1x1x1x16x128xf32>
    %292 = vector.shape_cast %291 : vector<1x1x1x16x128xf32> to vector<16x128xf32>
    %cst_272 = arith.constant dense<0.000000e+00> : vector<16xf32>
    %293 = vector.multi_reduction <add>, %292, %cst_272 [1] : vector<16x128xf32> to vector<16xf32>
    %294 = vector.shape_cast %293 : vector<16xf32> to vector<16x1xf32>
    %cst_273 = arith.constant dense<0.000000e+00> : vector<1xf32>
    %295 = vector.multi_reduction <add>, %294, %cst_273 [0] : vector<16x1xf32> to vector<1xf32>
    %296 = vector.shape_cast %295 : vector<1xf32> to vector<1x1xf32>
    %cst_274 = arith.constant 4.8828125E-4 : f32
    %297 = vector.broadcast %cst_274 : f32 to vector<1x1xf32>
    %298 = arith.mulf %296, %297 : vector<1x1xf32>
    %c0_275 = arith.constant 0 : index
    %c0_276 = arith.constant 0 : index
    %299 = vector.load %arg2[%c0_275, %c0_276] : memref<4x4xf32, #tpu.memory_space<vmem>>, vector<1x4xf32>
    %300 = vector.broadcast %298 : vector<1x1xf32> to vector<1x4xf32>
    %301 = arith.mulf %300, %299 : vector<1x4xf32>
    %c1_277 = arith.constant 1 : index
    %c1_278 = arith.constant 1 : index
    %c1_279 = arith.constant 1 : index
    %c1_280 = arith.constant 1 : index
    %c0_281 = arith.constant 0 : index
    %302 = vector.load %arg1[%c1_277, %c1_278, %c1_279, %c1_280, %c0_281] : memref<2x4x3x18x128xf32, #tpu.memory_space<vmem>>, vector<1x1x1x16x128xf32>
    %303 = vector.shape_cast %302 : vector<1x1x1x16x128xf32> to vector<16x128xf32>
    %cst_282 = arith.constant dense<0.000000e+00> : vector<16xf32>
    %304 = vector.multi_reduction <add>, %303, %cst_282 [1] : vector<16x128xf32> to vector<16xf32>
    %305 = vector.shape_cast %304 : vector<16xf32> to vector<16x1xf32>
    %cst_283 = arith.constant dense<0.000000e+00> : vector<1xf32>
    %306 = vector.multi_reduction <add>, %305, %cst_283 [0] : vector<16x1xf32> to vector<1xf32>
    %307 = vector.shape_cast %306 : vector<1xf32> to vector<1x1xf32>
    %cst_284 = arith.constant 4.8828125E-4 : f32
    %308 = vector.broadcast %cst_284 : f32 to vector<1x1xf32>
    %309 = arith.mulf %307, %308 : vector<1x1xf32>
    %c1_285 = arith.constant 1 : index
    %c0_286 = arith.constant 0 : index
    %310 = vector.load %arg2[%c1_285, %c0_286] : memref<4x4xf32, #tpu.memory_space<vmem>>, vector<1x4xf32>
    %311 = vector.broadcast %309 : vector<1x1xf32> to vector<1x4xf32>
    %312 = arith.mulf %311, %310 : vector<1x4xf32>
    %313 = arith.addf %301, %312 : vector<1x4xf32>
    %c1_287 = arith.constant 1 : index
    %c2_288 = arith.constant 2 : index
    %c1_289 = arith.constant 1 : index
    %c1_290 = arith.constant 1 : index
    %c0_291 = arith.constant 0 : index
    %314 = vector.load %arg1[%c1_287, %c2_288, %c1_289, %c1_290, %c0_291] : memref<2x4x3x18x128xf32, #tpu.memory_space<vmem>>, vector<1x1x1x16x128xf32>
    %315 = vector.shape_cast %314 : vector<1x1x1x16x128xf32> to vector<16x128xf32>
    %cst_292 = arith.constant dense<0.000000e+00> : vector<16xf32>
    %316 = vector.multi_reduction <add>, %315, %cst_292 [1] : vector<16x128xf32> to vector<16xf32>
    %317 = vector.shape_cast %316 : vector<16xf32> to vector<16x1xf32>
    %cst_293 = arith.constant dense<0.000000e+00> : vector<1xf32>
    %318 = vector.multi_reduction <add>, %317, %cst_293 [0] : vector<16x1xf32> to vector<1xf32>
    %319 = vector.shape_cast %318 : vector<1xf32> to vector<1x1xf32>
    %cst_294 = arith.constant 4.8828125E-4 : f32
    %320 = vector.broadcast %cst_294 : f32 to vector<1x1xf32>
    %321 = arith.mulf %319, %320 : vector<1x1xf32>
    %c2_295 = arith.constant 2 : index
    %c0_296 = arith.constant 0 : index
    %322 = vector.load %arg2[%c2_295, %c0_296] : memref<4x4xf32, #tpu.memory_space<vmem>>, vector<1x4xf32>
    %323 = vector.broadcast %321 : vector<1x1xf32> to vector<1x4xf32>
    %324 = arith.mulf %323, %322 : vector<1x4xf32>
    %325 = arith.addf %313, %324 : vector<1x4xf32>
    %c1_297 = arith.constant 1 : index
    %c3_298 = arith.constant 3 : index
    %c1_299 = arith.constant 1 : index
    %c1_300 = arith.constant 1 : index
    %c0_301 = arith.constant 0 : index
    %326 = vector.load %arg1[%c1_297, %c3_298, %c1_299, %c1_300, %c0_301] : memref<2x4x3x18x128xf32, #tpu.memory_space<vmem>>, vector<1x1x1x16x128xf32>
    %327 = vector.shape_cast %326 : vector<1x1x1x16x128xf32> to vector<16x128xf32>
    %cst_302 = arith.constant dense<0.000000e+00> : vector<16xf32>
    %328 = vector.multi_reduction <add>, %327, %cst_302 [1] : vector<16x128xf32> to vector<16xf32>
    %329 = vector.shape_cast %328 : vector<16xf32> to vector<16x1xf32>
    %cst_303 = arith.constant dense<0.000000e+00> : vector<1xf32>
    %330 = vector.multi_reduction <add>, %329, %cst_303 [0] : vector<16x1xf32> to vector<1xf32>
    %331 = vector.shape_cast %330 : vector<1xf32> to vector<1x1xf32>
    %cst_304 = arith.constant 4.8828125E-4 : f32
    %332 = vector.broadcast %cst_304 : f32 to vector<1x1xf32>
    %333 = arith.mulf %331, %332 : vector<1x1xf32>
    %c3_305 = arith.constant 3 : index
    %c0_306 = arith.constant 0 : index
    %334 = vector.load %arg2[%c3_305, %c0_306] : memref<4x4xf32, #tpu.memory_space<vmem>>, vector<1x4xf32>
    %335 = vector.broadcast %333 : vector<1x1xf32> to vector<1x4xf32>
    %336 = arith.mulf %335, %334 : vector<1x4xf32>
    %337 = arith.addf %325, %336 : vector<1x4xf32>
    %c0_307 = arith.constant 0 : index
    %c0_308 = arith.constant 0 : index
    %338 = vector.load %arg3[%c0_307, %c0_308] : memref<1x4xf32, #tpu.memory_space<vmem>>, vector<1x4xf32>
    %339 = arith.addf %337, %338 : vector<1x4xf32>
    %cst_309 = arith.constant 0.000000e+00 : f32
    %340 = vector.broadcast %cst_309 : f32 to vector<1x4xf32>
    %341 = arith.maximumf %339, %340 : vector<1x4xf32>
    %c0_310 = arith.constant 0 : index
    %c0_311 = arith.constant 0 : index
    %342 = vector.load %arg4[%c0_310, %c0_311] : memref<4x4xf32, #tpu.memory_space<vmem>>, vector<4x4xf32>
    %343 = vector.broadcast %341 : vector<1x4xf32> to vector<4x4xf32>
    %344 = arith.mulf %342, %343 : vector<4x4xf32>
    %cst_312 = arith.constant dense<0.000000e+00> : vector<4xf32>
    %345 = vector.multi_reduction <add>, %344, %cst_312 [1] : vector<4x4xf32> to vector<4xf32>
    %346 = vector.shape_cast %345 : vector<4xf32> to vector<4x1xf32>
    %cst_313 = arith.constant 1.000000e+00 : f32
    %347 = vector.broadcast %cst_313 : f32 to vector<4x1xf32>
    %348 = arith.addf %346, %347 : vector<4x1xf32>
    %c1_314 = arith.constant 1 : index
    %c0_315 = arith.constant 0 : index
    %c0_316 = arith.constant 0 : index
    %c0_317 = arith.constant 0 : index
    %c0_318 = arith.constant 0 : index
    %349 = vector.load %arg1[%c1_314, %c0_315, %c0_316, %c0_317, %c0_318] : memref<2x4x3x18x128xf32, #tpu.memory_space<vmem>>, vector<1x1x1x16x128xf32>
    %350 = vector.shape_cast %349 : vector<1x1x1x16x128xf32> to vector<16x128xf32>
    %c0_319 = arith.constant 0 : index
    %c0_320 = arith.constant 0 : index
    %351 = vector.load %arg5[%c0_319, %c0_320] : memref<36x128xf32, #tpu.memory_space<vmem>>, vector<1x128xf32>
    %352 = vector.broadcast %351 : vector<1x128xf32> to vector<16x128xf32>
    %353 = arith.mulf %350, %352 : vector<16x128xf32>
    %c1_321 = arith.constant 1 : index
    %c0_322 = arith.constant 0 : index
    %c1_323 = arith.constant 1 : index
    %c0_324 = arith.constant 0 : index
    %c0_325 = arith.constant 0 : index
    %354 = vector.load %arg1[%c1_321, %c0_322, %c1_323, %c0_324, %c0_325] : memref<2x4x3x18x128xf32, #tpu.memory_space<vmem>>, vector<1x1x1x16x128xf32>
    %355 = vector.shape_cast %354 : vector<1x1x1x16x128xf32> to vector<16x128xf32>
    %c1_326 = arith.constant 1 : index
    %c0_327 = arith.constant 0 : index
    %356 = vector.load %arg5[%c1_326, %c0_327] : memref<36x128xf32, #tpu.memory_space<vmem>>, vector<1x128xf32>
    %357 = vector.broadcast %356 : vector<1x128xf32> to vector<16x128xf32>
    %358 = arith.mulf %355, %357 : vector<16x128xf32>
    %359 = arith.addf %353, %358 : vector<16x128xf32>
    %c1_328 = arith.constant 1 : index
    %c0_329 = arith.constant 0 : index
    %c2_330 = arith.constant 2 : index
    %c0_331 = arith.constant 0 : index
    %c0_332 = arith.constant 0 : index
    %360 = vector.load %arg1[%c1_328, %c0_329, %c2_330, %c0_331, %c0_332] : memref<2x4x3x18x128xf32, #tpu.memory_space<vmem>>, vector<1x1x1x16x128xf32>
    %361 = vector.shape_cast %360 : vector<1x1x1x16x128xf32> to vector<16x128xf32>
    %c2_333 = arith.constant 2 : index
    %c0_334 = arith.constant 0 : index
    %362 = vector.load %arg5[%c2_333, %c0_334] : memref<36x128xf32, #tpu.memory_space<vmem>>, vector<1x128xf32>
    %363 = vector.broadcast %362 : vector<1x128xf32> to vector<16x128xf32>
    %364 = arith.mulf %361, %363 : vector<16x128xf32>
    %365 = arith.addf %359, %364 : vector<16x128xf32>
    %c1_335 = arith.constant 1 : index
    %c0_336 = arith.constant 0 : index
    %c0_337 = arith.constant 0 : index
    %c1_338 = arith.constant 1 : index
    %c0_339 = arith.constant 0 : index
    %366 = vector.load %arg1[%c1_335, %c0_336, %c0_337, %c1_338, %c0_339] : memref<2x4x3x18x128xf32, #tpu.memory_space<vmem>>, vector<1x1x1x16x128xf32>
    %367 = vector.shape_cast %366 : vector<1x1x1x16x128xf32> to vector<16x128xf32>
    %c3_340 = arith.constant 3 : index
    %c0_341 = arith.constant 0 : index
    %368 = vector.load %arg5[%c3_340, %c0_341] : memref<36x128xf32, #tpu.memory_space<vmem>>, vector<1x128xf32>
    %369 = vector.broadcast %368 : vector<1x128xf32> to vector<16x128xf32>
    %370 = arith.mulf %367, %369 : vector<16x128xf32>
    %371 = arith.addf %365, %370 : vector<16x128xf32>
    %c1_342 = arith.constant 1 : index
    %c0_343 = arith.constant 0 : index
    %c1_344 = arith.constant 1 : index
    %c1_345 = arith.constant 1 : index
    %c0_346 = arith.constant 0 : index
    %372 = vector.load %arg1[%c1_342, %c0_343, %c1_344, %c1_345, %c0_346] : memref<2x4x3x18x128xf32, #tpu.memory_space<vmem>>, vector<1x1x1x16x128xf32>
    %373 = vector.shape_cast %372 : vector<1x1x1x16x128xf32> to vector<16x128xf32>
    %c4_347 = arith.constant 4 : index
    %c0_348 = arith.constant 0 : index
    %374 = vector.load %arg5[%c4_347, %c0_348] : memref<36x128xf32, #tpu.memory_space<vmem>>, vector<1x128xf32>
    %375 = vector.broadcast %374 : vector<1x128xf32> to vector<16x128xf32>
    %376 = arith.mulf %373, %375 : vector<16x128xf32>
    %377 = arith.addf %371, %376 : vector<16x128xf32>
    %c1_349 = arith.constant 1 : index
    %c0_350 = arith.constant 0 : index
    %c2_351 = arith.constant 2 : index
    %c1_352 = arith.constant 1 : index
    %c0_353 = arith.constant 0 : index
    %378 = vector.load %arg1[%c1_349, %c0_350, %c2_351, %c1_352, %c0_353] : memref<2x4x3x18x128xf32, #tpu.memory_space<vmem>>, vector<1x1x1x16x128xf32>
    %379 = vector.shape_cast %378 : vector<1x1x1x16x128xf32> to vector<16x128xf32>
    %c5_354 = arith.constant 5 : index
    %c0_355 = arith.constant 0 : index
    %380 = vector.load %arg5[%c5_354, %c0_355] : memref<36x128xf32, #tpu.memory_space<vmem>>, vector<1x128xf32>
    %381 = vector.broadcast %380 : vector<1x128xf32> to vector<16x128xf32>
    %382 = arith.mulf %379, %381 : vector<16x128xf32>
    %383 = arith.addf %377, %382 : vector<16x128xf32>
    %c1_356 = arith.constant 1 : index
    %c0_357 = arith.constant 0 : index
    %c0_358 = arith.constant 0 : index
    %c2_359 = arith.constant 2 : index
    %c0_360 = arith.constant 0 : index
    %384 = vector.load %arg1[%c1_356, %c0_357, %c0_358, %c2_359, %c0_360] : memref<2x4x3x18x128xf32, #tpu.memory_space<vmem>>, vector<1x1x1x16x128xf32>
    %385 = vector.shape_cast %384 : vector<1x1x1x16x128xf32> to vector<16x128xf32>
    %c6_361 = arith.constant 6 : index
    %c0_362 = arith.constant 0 : index
    %386 = vector.load %arg5[%c6_361, %c0_362] : memref<36x128xf32, #tpu.memory_space<vmem>>, vector<1x128xf32>
    %387 = vector.broadcast %386 : vector<1x128xf32> to vector<16x128xf32>
    %388 = arith.mulf %385, %387 : vector<16x128xf32>
    %389 = arith.addf %383, %388 : vector<16x128xf32>
    %c1_363 = arith.constant 1 : index
    %c0_364 = arith.constant 0 : index
    %c1_365 = arith.constant 1 : index
    %c2_366 = arith.constant 2 : index
    %c0_367 = arith.constant 0 : index
    %390 = vector.load %arg1[%c1_363, %c0_364, %c1_365, %c2_366, %c0_367] : memref<2x4x3x18x128xf32, #tpu.memory_space<vmem>>, vector<1x1x1x16x128xf32>
    %391 = vector.shape_cast %390 : vector<1x1x1x16x128xf32> to vector<16x128xf32>
    %c7_368 = arith.constant 7 : index
    %c0_369 = arith.constant 0 : index
    %392 = vector.load %arg5[%c7_368, %c0_369] : memref<36x128xf32, #tpu.memory_space<vmem>>, vector<1x128xf32>
    %393 = vector.broadcast %392 : vector<1x128xf32> to vector<16x128xf32>
    %394 = arith.mulf %391, %393 : vector<16x128xf32>
    %395 = arith.addf %389, %394 : vector<16x128xf32>
    %c1_370 = arith.constant 1 : index
    %c0_371 = arith.constant 0 : index
    %c2_372 = arith.constant 2 : index
    %c2_373 = arith.constant 2 : index
    %c0_374 = arith.constant 0 : index
    %396 = vector.load %arg1[%c1_370, %c0_371, %c2_372, %c2_373, %c0_374] : memref<2x4x3x18x128xf32, #tpu.memory_space<vmem>>, vector<1x1x1x16x128xf32>
    %397 = vector.shape_cast %396 : vector<1x1x1x16x128xf32> to vector<16x128xf32>
    %c8_375 = arith.constant 8 : index
    %c0_376 = arith.constant 0 : index
    %398 = vector.load %arg5[%c8_375, %c0_376] : memref<36x128xf32, #tpu.memory_space<vmem>>, vector<1x128xf32>
    %399 = vector.broadcast %398 : vector<1x128xf32> to vector<16x128xf32>
    %400 = arith.mulf %397, %399 : vector<16x128xf32>
    %401 = arith.addf %395, %400 : vector<16x128xf32>
    %402 = vector.extract_strided_slice %348 {offsets = [0, 0], sizes = [1, 1], strides = [1, 1]} : vector<4x1xf32> to vector<1x1xf32>
    %403 = vector.broadcast %402 : vector<1x1xf32> to vector<16x128xf32>
    %404 = arith.mulf %401, %403 : vector<16x128xf32>
    %c1_377 = arith.constant 1 : index
    %c1_378 = arith.constant 1 : index
    %c0_379 = arith.constant 0 : index
    %c0_380 = arith.constant 0 : index
    %c0_381 = arith.constant 0 : index
    %405 = vector.load %arg1[%c1_377, %c1_378, %c0_379, %c0_380, %c0_381] : memref<2x4x3x18x128xf32, #tpu.memory_space<vmem>>, vector<1x1x1x16x128xf32>
    %406 = vector.shape_cast %405 : vector<1x1x1x16x128xf32> to vector<16x128xf32>
    %c9_382 = arith.constant 9 : index
    %c0_383 = arith.constant 0 : index
    %407 = vector.load %arg5[%c9_382, %c0_383] : memref<36x128xf32, #tpu.memory_space<vmem>>, vector<1x128xf32>
    %408 = vector.broadcast %407 : vector<1x128xf32> to vector<16x128xf32>
    %409 = arith.mulf %406, %408 : vector<16x128xf32>
    %c1_384 = arith.constant 1 : index
    %c1_385 = arith.constant 1 : index
    %c1_386 = arith.constant 1 : index
    %c0_387 = arith.constant 0 : index
    %c0_388 = arith.constant 0 : index
    %410 = vector.load %arg1[%c1_384, %c1_385, %c1_386, %c0_387, %c0_388] : memref<2x4x3x18x128xf32, #tpu.memory_space<vmem>>, vector<1x1x1x16x128xf32>
    %411 = vector.shape_cast %410 : vector<1x1x1x16x128xf32> to vector<16x128xf32>
    %c10_389 = arith.constant 10 : index
    %c0_390 = arith.constant 0 : index
    %412 = vector.load %arg5[%c10_389, %c0_390] : memref<36x128xf32, #tpu.memory_space<vmem>>, vector<1x128xf32>
    %413 = vector.broadcast %412 : vector<1x128xf32> to vector<16x128xf32>
    %414 = arith.mulf %411, %413 : vector<16x128xf32>
    %415 = arith.addf %409, %414 : vector<16x128xf32>
    %c1_391 = arith.constant 1 : index
    %c1_392 = arith.constant 1 : index
    %c2_393 = arith.constant 2 : index
    %c0_394 = arith.constant 0 : index
    %c0_395 = arith.constant 0 : index
    %416 = vector.load %arg1[%c1_391, %c1_392, %c2_393, %c0_394, %c0_395] : memref<2x4x3x18x128xf32, #tpu.memory_space<vmem>>, vector<1x1x1x16x128xf32>
    %417 = vector.shape_cast %416 : vector<1x1x1x16x128xf32> to vector<16x128xf32>
    %c11_396 = arith.constant 11 : index
    %c0_397 = arith.constant 0 : index
    %418 = vector.load %arg5[%c11_396, %c0_397] : memref<36x128xf32, #tpu.memory_space<vmem>>, vector<1x128xf32>
    %419 = vector.broadcast %418 : vector<1x128xf32> to vector<16x128xf32>
    %420 = arith.mulf %417, %419 : vector<16x128xf32>
    %421 = arith.addf %415, %420 : vector<16x128xf32>
    %c1_398 = arith.constant 1 : index
    %c1_399 = arith.constant 1 : index
    %c0_400 = arith.constant 0 : index
    %c1_401 = arith.constant 1 : index
    %c0_402 = arith.constant 0 : index
    %422 = vector.load %arg1[%c1_398, %c1_399, %c0_400, %c1_401, %c0_402] : memref<2x4x3x18x128xf32, #tpu.memory_space<vmem>>, vector<1x1x1x16x128xf32>
    %423 = vector.shape_cast %422 : vector<1x1x1x16x128xf32> to vector<16x128xf32>
    %c12_403 = arith.constant 12 : index
    %c0_404 = arith.constant 0 : index
    %424 = vector.load %arg5[%c12_403, %c0_404] : memref<36x128xf32, #tpu.memory_space<vmem>>, vector<1x128xf32>
    %425 = vector.broadcast %424 : vector<1x128xf32> to vector<16x128xf32>
    %426 = arith.mulf %423, %425 : vector<16x128xf32>
    %427 = arith.addf %421, %426 : vector<16x128xf32>
    %c1_405 = arith.constant 1 : index
    %c1_406 = arith.constant 1 : index
    %c1_407 = arith.constant 1 : index
    %c1_408 = arith.constant 1 : index
    %c0_409 = arith.constant 0 : index
    %428 = vector.load %arg1[%c1_405, %c1_406, %c1_407, %c1_408, %c0_409] : memref<2x4x3x18x128xf32, #tpu.memory_space<vmem>>, vector<1x1x1x16x128xf32>
    %429 = vector.shape_cast %428 : vector<1x1x1x16x128xf32> to vector<16x128xf32>
    %c13_410 = arith.constant 13 : index
    %c0_411 = arith.constant 0 : index
    %430 = vector.load %arg5[%c13_410, %c0_411] : memref<36x128xf32, #tpu.memory_space<vmem>>, vector<1x128xf32>
    %431 = vector.broadcast %430 : vector<1x128xf32> to vector<16x128xf32>
    %432 = arith.mulf %429, %431 : vector<16x128xf32>
    %433 = arith.addf %427, %432 : vector<16x128xf32>
    %c1_412 = arith.constant 1 : index
    %c1_413 = arith.constant 1 : index
    %c2_414 = arith.constant 2 : index
    %c1_415 = arith.constant 1 : index
    %c0_416 = arith.constant 0 : index
    %434 = vector.load %arg1[%c1_412, %c1_413, %c2_414, %c1_415, %c0_416] : memref<2x4x3x18x128xf32, #tpu.memory_space<vmem>>, vector<1x1x1x16x128xf32>
    %435 = vector.shape_cast %434 : vector<1x1x1x16x128xf32> to vector<16x128xf32>
    %c14_417 = arith.constant 14 : index
    %c0_418 = arith.constant 0 : index
    %436 = vector.load %arg5[%c14_417, %c0_418] : memref<36x128xf32, #tpu.memory_space<vmem>>, vector<1x128xf32>
    %437 = vector.broadcast %436 : vector<1x128xf32> to vector<16x128xf32>
    %438 = arith.mulf %435, %437 : vector<16x128xf32>
    %439 = arith.addf %433, %438 : vector<16x128xf32>
    %c1_419 = arith.constant 1 : index
    %c1_420 = arith.constant 1 : index
    %c0_421 = arith.constant 0 : index
    %c2_422 = arith.constant 2 : index
    %c0_423 = arith.constant 0 : index
    %440 = vector.load %arg1[%c1_419, %c1_420, %c0_421, %c2_422, %c0_423] : memref<2x4x3x18x128xf32, #tpu.memory_space<vmem>>, vector<1x1x1x16x128xf32>
    %441 = vector.shape_cast %440 : vector<1x1x1x16x128xf32> to vector<16x128xf32>
    %c15_424 = arith.constant 15 : index
    %c0_425 = arith.constant 0 : index
    %442 = vector.load %arg5[%c15_424, %c0_425] : memref<36x128xf32, #tpu.memory_space<vmem>>, vector<1x128xf32>
    %443 = vector.broadcast %442 : vector<1x128xf32> to vector<16x128xf32>
    %444 = arith.mulf %441, %443 : vector<16x128xf32>
    %445 = arith.addf %439, %444 : vector<16x128xf32>
    %c1_426 = arith.constant 1 : index
    %c1_427 = arith.constant 1 : index
    %c1_428 = arith.constant 1 : index
    %c2_429 = arith.constant 2 : index
    %c0_430 = arith.constant 0 : index
    %446 = vector.load %arg1[%c1_426, %c1_427, %c1_428, %c2_429, %c0_430] : memref<2x4x3x18x128xf32, #tpu.memory_space<vmem>>, vector<1x1x1x16x128xf32>
    %447 = vector.shape_cast %446 : vector<1x1x1x16x128xf32> to vector<16x128xf32>
    %c16_431 = arith.constant 16 : index
    %c0_432 = arith.constant 0 : index
    %448 = vector.load %arg5[%c16_431, %c0_432] : memref<36x128xf32, #tpu.memory_space<vmem>>, vector<1x128xf32>
    %449 = vector.broadcast %448 : vector<1x128xf32> to vector<16x128xf32>
    %450 = arith.mulf %447, %449 : vector<16x128xf32>
    %451 = arith.addf %445, %450 : vector<16x128xf32>
    %c1_433 = arith.constant 1 : index
    %c1_434 = arith.constant 1 : index
    %c2_435 = arith.constant 2 : index
    %c2_436 = arith.constant 2 : index
    %c0_437 = arith.constant 0 : index
    %452 = vector.load %arg1[%c1_433, %c1_434, %c2_435, %c2_436, %c0_437] : memref<2x4x3x18x128xf32, #tpu.memory_space<vmem>>, vector<1x1x1x16x128xf32>
    %453 = vector.shape_cast %452 : vector<1x1x1x16x128xf32> to vector<16x128xf32>
    %c17_438 = arith.constant 17 : index
    %c0_439 = arith.constant 0 : index
    %454 = vector.load %arg5[%c17_438, %c0_439] : memref<36x128xf32, #tpu.memory_space<vmem>>, vector<1x128xf32>
    %455 = vector.broadcast %454 : vector<1x128xf32> to vector<16x128xf32>
    %456 = arith.mulf %453, %455 : vector<16x128xf32>
    %457 = arith.addf %451, %456 : vector<16x128xf32>
    %458 = vector.extract_strided_slice %348 {offsets = [1, 0], sizes = [1, 1], strides = [1, 1]} : vector<4x1xf32> to vector<1x1xf32>
    %459 = vector.broadcast %458 : vector<1x1xf32> to vector<16x128xf32>
    %460 = arith.mulf %457, %459 : vector<16x128xf32>
    %461 = arith.addf %404, %460 : vector<16x128xf32>
    %c1_440 = arith.constant 1 : index
    %c2_441 = arith.constant 2 : index
    %c0_442 = arith.constant 0 : index
    %c0_443 = arith.constant 0 : index
    %c0_444 = arith.constant 0 : index
    %462 = vector.load %arg1[%c1_440, %c2_441, %c0_442, %c0_443, %c0_444] : memref<2x4x3x18x128xf32, #tpu.memory_space<vmem>>, vector<1x1x1x16x128xf32>
    %463 = vector.shape_cast %462 : vector<1x1x1x16x128xf32> to vector<16x128xf32>
    %c18_445 = arith.constant 18 : index
    %c0_446 = arith.constant 0 : index
    %464 = vector.load %arg5[%c18_445, %c0_446] : memref<36x128xf32, #tpu.memory_space<vmem>>, vector<1x128xf32>
    %465 = vector.broadcast %464 : vector<1x128xf32> to vector<16x128xf32>
    %466 = arith.mulf %463, %465 : vector<16x128xf32>
    %c1_447 = arith.constant 1 : index
    %c2_448 = arith.constant 2 : index
    %c1_449 = arith.constant 1 : index
    %c0_450 = arith.constant 0 : index
    %c0_451 = arith.constant 0 : index
    %467 = vector.load %arg1[%c1_447, %c2_448, %c1_449, %c0_450, %c0_451] : memref<2x4x3x18x128xf32, #tpu.memory_space<vmem>>, vector<1x1x1x16x128xf32>
    %468 = vector.shape_cast %467 : vector<1x1x1x16x128xf32> to vector<16x128xf32>
    %c19_452 = arith.constant 19 : index
    %c0_453 = arith.constant 0 : index
    %469 = vector.load %arg5[%c19_452, %c0_453] : memref<36x128xf32, #tpu.memory_space<vmem>>, vector<1x128xf32>
    %470 = vector.broadcast %469 : vector<1x128xf32> to vector<16x128xf32>
    %471 = arith.mulf %468, %470 : vector<16x128xf32>
    %472 = arith.addf %466, %471 : vector<16x128xf32>
    %c1_454 = arith.constant 1 : index
    %c2_455 = arith.constant 2 : index
    %c2_456 = arith.constant 2 : index
    %c0_457 = arith.constant 0 : index
    %c0_458 = arith.constant 0 : index
    %473 = vector.load %arg1[%c1_454, %c2_455, %c2_456, %c0_457, %c0_458] : memref<2x4x3x18x128xf32, #tpu.memory_space<vmem>>, vector<1x1x1x16x128xf32>
    %474 = vector.shape_cast %473 : vector<1x1x1x16x128xf32> to vector<16x128xf32>
    %c20_459 = arith.constant 20 : index
    %c0_460 = arith.constant 0 : index
    %475 = vector.load %arg5[%c20_459, %c0_460] : memref<36x128xf32, #tpu.memory_space<vmem>>, vector<1x128xf32>
    %476 = vector.broadcast %475 : vector<1x128xf32> to vector<16x128xf32>
    %477 = arith.mulf %474, %476 : vector<16x128xf32>
    %478 = arith.addf %472, %477 : vector<16x128xf32>
    %c1_461 = arith.constant 1 : index
    %c2_462 = arith.constant 2 : index
    %c0_463 = arith.constant 0 : index
    %c1_464 = arith.constant 1 : index
    %c0_465 = arith.constant 0 : index
    %479 = vector.load %arg1[%c1_461, %c2_462, %c0_463, %c1_464, %c0_465] : memref<2x4x3x18x128xf32, #tpu.memory_space<vmem>>, vector<1x1x1x16x128xf32>
    %480 = vector.shape_cast %479 : vector<1x1x1x16x128xf32> to vector<16x128xf32>
    %c21_466 = arith.constant 21 : index
    %c0_467 = arith.constant 0 : index
    %481 = vector.load %arg5[%c21_466, %c0_467] : memref<36x128xf32, #tpu.memory_space<vmem>>, vector<1x128xf32>
    %482 = vector.broadcast %481 : vector<1x128xf32> to vector<16x128xf32>
    %483 = arith.mulf %480, %482 : vector<16x128xf32>
    %484 = arith.addf %478, %483 : vector<16x128xf32>
    %c1_468 = arith.constant 1 : index
    %c2_469 = arith.constant 2 : index
    %c1_470 = arith.constant 1 : index
    %c1_471 = arith.constant 1 : index
    %c0_472 = arith.constant 0 : index
    %485 = vector.load %arg1[%c1_468, %c2_469, %c1_470, %c1_471, %c0_472] : memref<2x4x3x18x128xf32, #tpu.memory_space<vmem>>, vector<1x1x1x16x128xf32>
    %486 = vector.shape_cast %485 : vector<1x1x1x16x128xf32> to vector<16x128xf32>
    %c22_473 = arith.constant 22 : index
    %c0_474 = arith.constant 0 : index
    %487 = vector.load %arg5[%c22_473, %c0_474] : memref<36x128xf32, #tpu.memory_space<vmem>>, vector<1x128xf32>
    %488 = vector.broadcast %487 : vector<1x128xf32> to vector<16x128xf32>
    %489 = arith.mulf %486, %488 : vector<16x128xf32>
    %490 = arith.addf %484, %489 : vector<16x128xf32>
    %c1_475 = arith.constant 1 : index
    %c2_476 = arith.constant 2 : index
    %c2_477 = arith.constant 2 : index
    %c1_478 = arith.constant 1 : index
    %c0_479 = arith.constant 0 : index
    %491 = vector.load %arg1[%c1_475, %c2_476, %c2_477, %c1_478, %c0_479] : memref<2x4x3x18x128xf32, #tpu.memory_space<vmem>>, vector<1x1x1x16x128xf32>
    %492 = vector.shape_cast %491 : vector<1x1x1x16x128xf32> to vector<16x128xf32>
    %c23_480 = arith.constant 23 : index
    %c0_481 = arith.constant 0 : index
    %493 = vector.load %arg5[%c23_480, %c0_481] : memref<36x128xf32, #tpu.memory_space<vmem>>, vector<1x128xf32>
    %494 = vector.broadcast %493 : vector<1x128xf32> to vector<16x128xf32>
    %495 = arith.mulf %492, %494 : vector<16x128xf32>
    %496 = arith.addf %490, %495 : vector<16x128xf32>
    %c1_482 = arith.constant 1 : index
    %c2_483 = arith.constant 2 : index
    %c0_484 = arith.constant 0 : index
    %c2_485 = arith.constant 2 : index
    %c0_486 = arith.constant 0 : index
    %497 = vector.load %arg1[%c1_482, %c2_483, %c0_484, %c2_485, %c0_486] : memref<2x4x3x18x128xf32, #tpu.memory_space<vmem>>, vector<1x1x1x16x128xf32>
    %498 = vector.shape_cast %497 : vector<1x1x1x16x128xf32> to vector<16x128xf32>
    %c24_487 = arith.constant 24 : index
    %c0_488 = arith.constant 0 : index
    %499 = vector.load %arg5[%c24_487, %c0_488] : memref<36x128xf32, #tpu.memory_space<vmem>>, vector<1x128xf32>
    %500 = vector.broadcast %499 : vector<1x128xf32> to vector<16x128xf32>
    %501 = arith.mulf %498, %500 : vector<16x128xf32>
    %502 = arith.addf %496, %501 : vector<16x128xf32>
    %c1_489 = arith.constant 1 : index
    %c2_490 = arith.constant 2 : index
    %c1_491 = arith.constant 1 : index
    %c2_492 = arith.constant 2 : index
    %c0_493 = arith.constant 0 : index
    %503 = vector.load %arg1[%c1_489, %c2_490, %c1_491, %c2_492, %c0_493] : memref<2x4x3x18x128xf32, #tpu.memory_space<vmem>>, vector<1x1x1x16x128xf32>
    %504 = vector.shape_cast %503 : vector<1x1x1x16x128xf32> to vector<16x128xf32>
    %c25_494 = arith.constant 25 : index
    %c0_495 = arith.constant 0 : index
    %505 = vector.load %arg5[%c25_494, %c0_495] : memref<36x128xf32, #tpu.memory_space<vmem>>, vector<1x128xf32>
    %506 = vector.broadcast %505 : vector<1x128xf32> to vector<16x128xf32>
    %507 = arith.mulf %504, %506 : vector<16x128xf32>
    %508 = arith.addf %502, %507 : vector<16x128xf32>
    %c1_496 = arith.constant 1 : index
    %c2_497 = arith.constant 2 : index
    %c2_498 = arith.constant 2 : index
    %c2_499 = arith.constant 2 : index
    %c0_500 = arith.constant 0 : index
    %509 = vector.load %arg1[%c1_496, %c2_497, %c2_498, %c2_499, %c0_500] : memref<2x4x3x18x128xf32, #tpu.memory_space<vmem>>, vector<1x1x1x16x128xf32>
    %510 = vector.shape_cast %509 : vector<1x1x1x16x128xf32> to vector<16x128xf32>
    %c26_501 = arith.constant 26 : index
    %c0_502 = arith.constant 0 : index
    %511 = vector.load %arg5[%c26_501, %c0_502] : memref<36x128xf32, #tpu.memory_space<vmem>>, vector<1x128xf32>
    %512 = vector.broadcast %511 : vector<1x128xf32> to vector<16x128xf32>
    %513 = arith.mulf %510, %512 : vector<16x128xf32>
    %514 = arith.addf %508, %513 : vector<16x128xf32>
    %515 = vector.extract_strided_slice %348 {offsets = [2, 0], sizes = [1, 1], strides = [1, 1]} : vector<4x1xf32> to vector<1x1xf32>
    %516 = vector.broadcast %515 : vector<1x1xf32> to vector<16x128xf32>
    %517 = arith.mulf %514, %516 : vector<16x128xf32>
    %518 = arith.addf %461, %517 : vector<16x128xf32>
    %c1_503 = arith.constant 1 : index
    %c3_504 = arith.constant 3 : index
    %c0_505 = arith.constant 0 : index
    %c0_506 = arith.constant 0 : index
    %c0_507 = arith.constant 0 : index
    %519 = vector.load %arg1[%c1_503, %c3_504, %c0_505, %c0_506, %c0_507] : memref<2x4x3x18x128xf32, #tpu.memory_space<vmem>>, vector<1x1x1x16x128xf32>
    %520 = vector.shape_cast %519 : vector<1x1x1x16x128xf32> to vector<16x128xf32>
    %c27_508 = arith.constant 27 : index
    %c0_509 = arith.constant 0 : index
    %521 = vector.load %arg5[%c27_508, %c0_509] : memref<36x128xf32, #tpu.memory_space<vmem>>, vector<1x128xf32>
    %522 = vector.broadcast %521 : vector<1x128xf32> to vector<16x128xf32>
    %523 = arith.mulf %520, %522 : vector<16x128xf32>
    %c1_510 = arith.constant 1 : index
    %c3_511 = arith.constant 3 : index
    %c1_512 = arith.constant 1 : index
    %c0_513 = arith.constant 0 : index
    %c0_514 = arith.constant 0 : index
    %524 = vector.load %arg1[%c1_510, %c3_511, %c1_512, %c0_513, %c0_514] : memref<2x4x3x18x128xf32, #tpu.memory_space<vmem>>, vector<1x1x1x16x128xf32>
    %525 = vector.shape_cast %524 : vector<1x1x1x16x128xf32> to vector<16x128xf32>
    %c28_515 = arith.constant 28 : index
    %c0_516 = arith.constant 0 : index
    %526 = vector.load %arg5[%c28_515, %c0_516] : memref<36x128xf32, #tpu.memory_space<vmem>>, vector<1x128xf32>
    %527 = vector.broadcast %526 : vector<1x128xf32> to vector<16x128xf32>
    %528 = arith.mulf %525, %527 : vector<16x128xf32>
    %529 = arith.addf %523, %528 : vector<16x128xf32>
    %c1_517 = arith.constant 1 : index
    %c3_518 = arith.constant 3 : index
    %c2_519 = arith.constant 2 : index
    %c0_520 = arith.constant 0 : index
    %c0_521 = arith.constant 0 : index
    %530 = vector.load %arg1[%c1_517, %c3_518, %c2_519, %c0_520, %c0_521] : memref<2x4x3x18x128xf32, #tpu.memory_space<vmem>>, vector<1x1x1x16x128xf32>
    %531 = vector.shape_cast %530 : vector<1x1x1x16x128xf32> to vector<16x128xf32>
    %c29_522 = arith.constant 29 : index
    %c0_523 = arith.constant 0 : index
    %532 = vector.load %arg5[%c29_522, %c0_523] : memref<36x128xf32, #tpu.memory_space<vmem>>, vector<1x128xf32>
    %533 = vector.broadcast %532 : vector<1x128xf32> to vector<16x128xf32>
    %534 = arith.mulf %531, %533 : vector<16x128xf32>
    %535 = arith.addf %529, %534 : vector<16x128xf32>
    %c1_524 = arith.constant 1 : index
    %c3_525 = arith.constant 3 : index
    %c0_526 = arith.constant 0 : index
    %c1_527 = arith.constant 1 : index
    %c0_528 = arith.constant 0 : index
    %536 = vector.load %arg1[%c1_524, %c3_525, %c0_526, %c1_527, %c0_528] : memref<2x4x3x18x128xf32, #tpu.memory_space<vmem>>, vector<1x1x1x16x128xf32>
    %537 = vector.shape_cast %536 : vector<1x1x1x16x128xf32> to vector<16x128xf32>
    %c30_529 = arith.constant 30 : index
    %c0_530 = arith.constant 0 : index
    %538 = vector.load %arg5[%c30_529, %c0_530] : memref<36x128xf32, #tpu.memory_space<vmem>>, vector<1x128xf32>
    %539 = vector.broadcast %538 : vector<1x128xf32> to vector<16x128xf32>
    %540 = arith.mulf %537, %539 : vector<16x128xf32>
    %541 = arith.addf %535, %540 : vector<16x128xf32>
    %c1_531 = arith.constant 1 : index
    %c3_532 = arith.constant 3 : index
    %c1_533 = arith.constant 1 : index
    %c1_534 = arith.constant 1 : index
    %c0_535 = arith.constant 0 : index
    %542 = vector.load %arg1[%c1_531, %c3_532, %c1_533, %c1_534, %c0_535] : memref<2x4x3x18x128xf32, #tpu.memory_space<vmem>>, vector<1x1x1x16x128xf32>
    %543 = vector.shape_cast %542 : vector<1x1x1x16x128xf32> to vector<16x128xf32>
    %c31_536 = arith.constant 31 : index
    %c0_537 = arith.constant 0 : index
    %544 = vector.load %arg5[%c31_536, %c0_537] : memref<36x128xf32, #tpu.memory_space<vmem>>, vector<1x128xf32>
    %545 = vector.broadcast %544 : vector<1x128xf32> to vector<16x128xf32>
    %546 = arith.mulf %543, %545 : vector<16x128xf32>
    %547 = arith.addf %541, %546 : vector<16x128xf32>
    %c1_538 = arith.constant 1 : index
    %c3_539 = arith.constant 3 : index
    %c2_540 = arith.constant 2 : index
    %c1_541 = arith.constant 1 : index
    %c0_542 = arith.constant 0 : index
    %548 = vector.load %arg1[%c1_538, %c3_539, %c2_540, %c1_541, %c0_542] : memref<2x4x3x18x128xf32, #tpu.memory_space<vmem>>, vector<1x1x1x16x128xf32>
    %549 = vector.shape_cast %548 : vector<1x1x1x16x128xf32> to vector<16x128xf32>
    %c32_543 = arith.constant 32 : index
    %c0_544 = arith.constant 0 : index
    %550 = vector.load %arg5[%c32_543, %c0_544] : memref<36x128xf32, #tpu.memory_space<vmem>>, vector<1x128xf32>
    %551 = vector.broadcast %550 : vector<1x128xf32> to vector<16x128xf32>
    %552 = arith.mulf %549, %551 : vector<16x128xf32>
    %553 = arith.addf %547, %552 : vector<16x128xf32>
    %c1_545 = arith.constant 1 : index
    %c3_546 = arith.constant 3 : index
    %c0_547 = arith.constant 0 : index
    %c2_548 = arith.constant 2 : index
    %c0_549 = arith.constant 0 : index
    %554 = vector.load %arg1[%c1_545, %c3_546, %c0_547, %c2_548, %c0_549] : memref<2x4x3x18x128xf32, #tpu.memory_space<vmem>>, vector<1x1x1x16x128xf32>
    %555 = vector.shape_cast %554 : vector<1x1x1x16x128xf32> to vector<16x128xf32>
    %c33_550 = arith.constant 33 : index
    %c0_551 = arith.constant 0 : index
    %556 = vector.load %arg5[%c33_550, %c0_551] : memref<36x128xf32, #tpu.memory_space<vmem>>, vector<1x128xf32>
    %557 = vector.broadcast %556 : vector<1x128xf32> to vector<16x128xf32>
    %558 = arith.mulf %555, %557 : vector<16x128xf32>
    %559 = arith.addf %553, %558 : vector<16x128xf32>
    %c1_552 = arith.constant 1 : index
    %c3_553 = arith.constant 3 : index
    %c1_554 = arith.constant 1 : index
    %c2_555 = arith.constant 2 : index
    %c0_556 = arith.constant 0 : index
    %560 = vector.load %arg1[%c1_552, %c3_553, %c1_554, %c2_555, %c0_556] : memref<2x4x3x18x128xf32, #tpu.memory_space<vmem>>, vector<1x1x1x16x128xf32>
    %561 = vector.shape_cast %560 : vector<1x1x1x16x128xf32> to vector<16x128xf32>
    %c34_557 = arith.constant 34 : index
    %c0_558 = arith.constant 0 : index
    %562 = vector.load %arg5[%c34_557, %c0_558] : memref<36x128xf32, #tpu.memory_space<vmem>>, vector<1x128xf32>
    %563 = vector.broadcast %562 : vector<1x128xf32> to vector<16x128xf32>
    %564 = arith.mulf %561, %563 : vector<16x128xf32>
    %565 = arith.addf %559, %564 : vector<16x128xf32>
    %c1_559 = arith.constant 1 : index
    %c3_560 = arith.constant 3 : index
    %c2_561 = arith.constant 2 : index
    %c2_562 = arith.constant 2 : index
    %c0_563 = arith.constant 0 : index
    %566 = vector.load %arg1[%c1_559, %c3_560, %c2_561, %c2_562, %c0_563] : memref<2x4x3x18x128xf32, #tpu.memory_space<vmem>>, vector<1x1x1x16x128xf32>
    %567 = vector.shape_cast %566 : vector<1x1x1x16x128xf32> to vector<16x128xf32>
    %c35_564 = arith.constant 35 : index
    %c0_565 = arith.constant 0 : index
    %568 = vector.load %arg5[%c35_564, %c0_565] : memref<36x128xf32, #tpu.memory_space<vmem>>, vector<1x128xf32>
    %569 = vector.broadcast %568 : vector<1x128xf32> to vector<16x128xf32>
    %570 = arith.mulf %567, %569 : vector<16x128xf32>
    %571 = arith.addf %565, %570 : vector<16x128xf32>
    %572 = vector.extract_strided_slice %348 {offsets = [3, 0], sizes = [1, 1], strides = [1, 1]} : vector<4x1xf32> to vector<1x1xf32>
    %573 = vector.broadcast %572 : vector<1x1xf32> to vector<16x128xf32>
    %574 = arith.mulf %571, %573 : vector<16x128xf32>
    %575 = arith.addf %518, %574 : vector<16x128xf32>
    %c0_566 = arith.constant 0 : index
    %c0_567 = arith.constant 0 : index
    %576 = vector.load %arg6[%c0_566, %c0_567] : memref<1x128xf32, #tpu.memory_space<vmem>>, vector<1x128xf32>
    %577 = vector.broadcast %576 : vector<1x128xf32> to vector<16x128xf32>
    %578 = arith.addf %575, %577 : vector<16x128xf32>
    %c1_568 = arith.constant 1 : index
    %c0_569 = arith.constant 0 : index
    %c0_570 = arith.constant 0 : index
    %579 = vector.load %arg7[%c1_568, %c0_569, %c0_570] : memref<2x16x128xf32, #tpu.memory_space<vmem>>, vector<1x16x128xf32>
    %580 = vector.shape_cast %579 : vector<1x16x128xf32> to vector<16x128xf32>
    %581 = vector.shape_cast %578 : vector<16x128xf32> to vector<1x16x128xf32>
    tpu.vector_store %arg7[%c1_568, %c0_569, %c0_570], %581 {strides = array<i32>} : memref<2x16x128xf32, #tpu.memory_space<vmem>>, vector<1x16x128xf32>,
    return
  }
  func.func @transform_0(%arg0: i32) -> (i32, i32, i32, i32, i32) {
    %c0_i32 = arith.constant 0 : i32
    %c0_i32_0 = arith.constant 0 : i32
    %c0_i32_1 = arith.constant 0 : i32
    %c0_i32_2 = arith.constant 0 : i32
    %c0_i32_3 = arith.constant 0 : i32
    return %arg0, %c0_i32, %c0_i32_0, %c0_i32_1, %c0_i32_2 : i32, i32, i32, i32, i32
  }
  func.func @transform_1(%arg0: i32) -> (i32, i32) {
    %c0_i32 = arith.constant 0 : i32
    %c0_i32_0 = arith.constant 0 : i32
    %c0_i32_1 = arith.constant 0 : i32
    return %c0_i32, %c0_i32_0 : i32, i32
  }
  func.func @transform_2(%arg0: i32) -> (i32, i32) {
    %c0_i32 = arith.constant 0 : i32
    %c0_i32_0 = arith.constant 0 : i32
    %c0_i32_1 = arith.constant 0 : i32
    return %c0_i32, %c0_i32_0 : i32, i32
  }
  func.func @transform_3(%arg0: i32) -> (i32, i32) {
    %c0_i32 = arith.constant 0 : i32
    %c0_i32_0 = arith.constant 0 : i32
    %c0_i32_1 = arith.constant 0 : i32
    return %c0_i32, %c0_i32_0 : i32, i32
  }
  func.func @transform_4(%arg0: i32) -> (i32, i32) {
    %c0_i32 = arith.constant 0 : i32
    %c0_i32_0 = arith.constant 0 : i32
    %c0_i32_1 = arith.constant 0 : i32
    return %c0_i32, %c0_i32_0 : i32, i32
  }
  func.func @transform_5(%arg0: i32) -> (i32, i32) {
    %c0_i32 = arith.constant 0 : i32
    %c0_i32_0 = arith.constant 0 : i32
    %c0_i32_1 = arith.constant 0 : i32
    return %c0_i32, %c0_i32_0 : i32, i32
  }
  func.func @transform_6(%arg0: i32) -> (i32, i32, i32) {
    %c0_i32 = arith.constant 0 : i32
    %c0_i32_0 = arith.constant 0 : i32
    %c0_i32_1 = arith.constant 0 : i32
    return %arg0, %c0_i32, %c0_i32_0 : i32, i32, i32
  }
}

</mosaic_0001>

<llo_original>
// kernel: tpu_custom_call.1
$region0: #{tpu_custom_call.1}
  #allocation0 [shape = 'u32[]', space=smem, size = 0x4, offset = 0x4, fixed_abs, tag = 'smem constant byte address 0x4 - core index']
  #allocation1 [shape = 'u32[144,128]{1,0:T(1,128)}', space=vmem, size = 0x12000, scoped, tag = 'internal scratch']
  %s0 = inlined_call_operand.vmem [shape: f32[2,4,3,18,128], index: 0, kind: input, shape index: {}]
  %s1 = inlined_call_operand.vmem [shape: f32[4,4], index: 1, kind: input, shape index: {}]
  %s2 = inlined_call_operand.vmem [shape: f32[1,4], index: 2, kind: input, shape index: {}]
  %s3 = inlined_call_operand.vmem [shape: f32[4,4], index: 3, kind: input, shape index: {}]
  %s4 = inlined_call_operand.vmem [shape: f32[36,128], index: 4, kind: input, shape index: {}]
  %s5 = inlined_call_operand.vmem [shape: f32[1,128], index: 5, kind: input, shape index: {}]
  %s6 = inlined_call_operand.hbm [shape: f32[2,16,128], index: 6, kind: output, shape index: {}]
  %s7 = sld [smem:[#allocation0]]
  $region34: #{tpu_custom_call.1} parent=0
    _
  %s9 = ssub.s32 1, %s7
  %s10 = scalar_select 0, %s9, %s7
  $region1: #{tpu_custom_call.1} parent=0
    #allocation2 [shape = 'u8[16384]{0}', space=vmem, size = 0x4000, scoped, tag = 'output window, operand 0, single buffered']
    #allocation3 [shape = 's32[1]{0}', space=sflag, size = 0x4, scoped, tag = 'scoped memory for tpu_custom_call.1']
    %11 = vsyncpa [#allocation3], 0
    // Predicated region
    $region2: #{tpu_custom_call.1} parent=1 // pred_check
      _
    $region3: #{tpu_custom_call.1} parent=1 // pred_check_branch
      %13 = sbr.rel (0) target = $region5
    $region4: #{tpu_custom_call.1} parent=1 // pred_region
      _
    $region5: #{tpu_custom_call.1} parent=1 // pred_fallthru
      _
    // Predicated region
    $region6: #{tpu_custom_call.1} parent=1 // pred_check
      _
    $region7: #{tpu_custom_call.1} parent=1 // pred_check_branch
      %15 = sbr.rel (0) target = $region9
    $region8: #{tpu_custom_call.1} parent=1 // pred_region
      _
    $region9: #{tpu_custom_call.1} parent=1 // pred_fallthru
      _
    // Predicated region
    $region10: #{tpu_custom_call.1} parent=1 // pred_check
      _
    $region11: #{tpu_custom_call.1} parent=1 // pred_check_branch
      %17 = sbr.rel (0) target = $region13
    $region12: #{tpu_custom_call.1} parent=1 // pred_region
      _
    $region13: #{tpu_custom_call.1} parent=1 // pred_fallthru
      _
    // Predicated region
    $region14: #{tpu_custom_call.1} parent=1 // pred_check
      _
    $region15: #{tpu_custom_call.1} parent=1 // pred_check_branch
      %19 = sbr.rel (0) target = $region17
    $region16: #{tpu_custom_call.1} parent=1 // pred_region
      _
    $region17: #{tpu_custom_call.1} parent=1 // pred_fallthru
      _
    // Predicated region
    $region18: #{tpu_custom_call.1} parent=1 // pred_check
      _
    $region19: #{tpu_custom_call.1} parent=1 // pred_check_branch
      %21 = sbr.rel (0) target = $region21
    $region20: #{tpu_custom_call.1} parent=1 // pred_region
      _
    $region21: #{tpu_custom_call.1} parent=1 // pred_fallthru
      _
    // Predicated region
    $region22: #{tpu_custom_call.1} parent=1 // pred_check
      _
    $region23: #{tpu_custom_call.1} parent=1 // pred_check_branch
      %23 = sbr.rel (0) target = $region25
    $region24: #{tpu_custom_call.1} parent=1 // pred_region
      _
    $region25: #{tpu_custom_call.1} parent=1 // pred_fallthru
      _
    %s24 = scalar_lea.vmem %s0, 24
    %v25 = vld [vmem:[%s24 + $0x1] sm:$0xff]
    %v26 = vld [vmem:[%s24 + $0x9] sm:$0xff]
    %27 = vadd.xlane.f32.xlu0 %v25
    %v28 = vpop.xlane.xlu0 %27
    %29 = vadd.xlane.f32.xlu0 %v26
    %v30 = vpop.xlane.xlu0 %29
    %v31 = vadd.f32 %v28, %v30
    %v32 = vrot.slane %v31, 4
    %v33 = vadd.f32 %v31, %v32
    %v34 = vrot.slane %v33, 2
    %v35 = vadd.f32 %v33, %v34
    %v36 = vrot.slane %v35, 1
    %v37 = vadd.f32 %v35, %v36
    %v38 = vmul.f32 %v37, 0.00048828125
    %v39 = vld [vmem:[%s1] sm:$0x1]
    %v40 = vmul.f32 %v38, %v39
    %s41 = scalar_lea.vmem %s0, 96
    %v42 = vld [vmem:[%s41 + $0x1] sm:$0xff]
    %v43 = vld [vmem:[%s41 + $0x9] sm:$0xff]
    %44 = vadd.xlane.f32.xlu0 %v42
    %v45 = vpop.xlane.xlu0 %44
    %46 = vadd.xlane.f32.xlu0 %v43
    %v47 = vpop.xlane.xlu0 %46
    %v48 = vadd.f32 %v45, %v47
    %v49 = vrot.slane %v48, 4
    %v50 = vadd.f32 %v48, %v49
    %v51 = vrot.slane %v50, 2
    %v52 = vadd.f32 %v50, %v51
    %v53 = vrot.slane %v52, 1
    %v54 = vadd.f32 %v52, %v53
    %v55 = vmul.f32 %v54, 0.00048828125
    %v56 = vld [vmem:[%s1 + $0x1] sm:$0x1]
    %v57 = vmul.f32 %v55, %v56
    %v58 = vadd.f32 %v40, %v57
    %s59 = scalar_lea.vmem %s0, 168
    %v60 = vld [vmem:[%s59 + $0x1] sm:$0xff]
    %v61 = vld [vmem:[%s59 + $0x9] sm:$0xff]
    %62 = vadd.xlane.f32.xlu0 %v60
    %v63 = vpop.xlane.xlu0 %62
    %64 = vadd.xlane.f32.xlu0 %v61
    %v65 = vpop.xlane.xlu0 %64
    %v66 = vadd.f32 %v63, %v65
    %v67 = vrot.slane %v66, 4
    %v68 = vadd.f32 %v66, %v67
    %v69 = vrot.slane %v68, 2
    %v70 = vadd.f32 %v68, %v69
    %v71 = vrot.slane %v70, 1
    %v72 = vadd.f32 %v70, %v71
    %v73 = vmul.f32 %v72, 0.00048828125
    %v74 = vld [vmem:[%s1 + $0x2] sm:$0x1]
    %v75 = vmul.f32 %v73, %v74
    %v76 = vadd.f32 %v58, %v75
    %s77 = scalar_lea.vmem %s0, 240
    %v78 = vld [vmem:[%s77 + $0x1] sm:$0xff]
    %v79 = vld [vmem:[%s77 + $0x9] sm:$0xff]
    %80 = vadd.xlane.f32.xlu0 %v78
    %v81 = vpop.xlane.xlu0 %80
    %82 = vadd.xlane.f32.xlu0 %v79
    %v83 = vpop.xlane.xlu0 %82
    %v84 = vadd.f32 %v81, %v83
    %v85 = vrot.slane %v84, 4
    %v86 = vadd.f32 %v84, %v85
    %v87 = vrot.slane %v86, 2
    %v88 = vadd.f32 %v86, %v87
    %v89 = vrot.slane %v88, 1
    %v90 = vadd.f32 %v88, %v89
    %v91 = vmul.f32 %v90, 0.00048828125
    %v92 = vld [vmem:[%s1 + $0x3] sm:$0x1]
    %v93 = vmul.f32 %v91, %v92
    %v94 = vadd.f32 %v76, %v93
    %v95 = vld [vmem:[%s2] sm:$0x1]
    %v96 = vadd.f32 %v94, %v95
    %v97 = vmax.f32 %v96, 0.0
    %v98 = vld [vmem:[%s3] sm:$0xf]
    %v99 = vlaneseq
    %v100 = vshrl.u32 %v99, 7
    %v101 = vsub.s32 0, %v100
    %v102 = vrot.slane %v97, %v101
    %v103 = vmul.f32 %v98, %v102
    %vm104 = vcmask 27648
    %v105 = vsel %vm104, %v103, 0.0
    %106 = vadd.xlane.f32.xlu0 %v105
    %v107 = vpop.xlane.xlu0 %106
    %v108 = vadd.f32 %v107, 1.0
    %v109 = vld [vmem:[%s0] sm:$0xff]
    %v110 = vld [vmem:[%s0 + $0x8] sm:$0xff]
    %v111 = vld [vmem:[%s4] sm:$0x1]
    %v112 = vlaneseq
    %v113 = vshrl.u32 %v112, 7
    %v114 = vsub.s32 0, %v113
    %v115 = vrot.slane %v111, %v114
    %v116 = vmul.f32 %v109, %v115
    %v117 = vmul.f32 %v110, %v115
    %v118 = vld [vmem:[%s24] sm:$0xff]
    %v119 = vld [vmem:[%s24 + $0x8] sm:$0xff]
    %v120 = vld [vmem:[%s4 + $0x1] sm:$0x1]
    %v121 = vlaneseq
    %v122 = vshrl.u32 %v121, 7
    %v123 = vsub.s32 0, %v122
    %v124 = vrot.slane %v120, %v123
    %v125 = vmul.f32 %v118, %v124
    %v126 = vmul.f32 %v119, %v124
    %v127 = vadd.f32 %v116, %v125
    %v128 = vadd.f32 %v117, %v126
    %s129 = scalar_lea.vmem %s0, 48
    %v130 = vld [vmem:[%s129] sm:$0xff]
    %v131 = vld [vmem:[%s129 + $0x8] sm:$0xff]
    %v132 = vld [vmem:[%s4 + $0x2] sm:$0x1]
    %v133 = vlaneseq
    %v134 = vshrl.u32 %v133, 7
    %v135 = vsub.s32 0, %v134
    %v136 = vrot.slane %v132, %v135
    %v137 = vmul.f32 %v130, %v136
    %v138 = vmul.f32 %v131, %v136
    %v139 = vadd.f32 %v127, %v137
    %v140 = vadd.f32 %v128, %v138
    %v141 = vld [vmem:[%s0 + $0x1] sm:$0xff]
    %v142 = vld [vmem:[%s0 + $0x9] sm:$0xff]
    %v143 = vld [vmem:[%s4 + $0x3] sm:$0x1]
    %v144 = vlaneseq
    %v145 = vshrl.u32 %v144, 7
    %v146 = vsub.s32 0, %v145
    %v147 = vrot.slane %v143, %v146
    %v148 = vmul.f32 %v141, %v147
    %v149 = vmul.f32 %v142, %v147
    %v150 = vadd.f32 %v139, %v148
    %v151 = vadd.f32 %v140, %v149
    %v152 = vld [vmem:[%s4 + $0x4] sm:$0x1]
    %v153 = vlaneseq
    %v154 = vshrl.u32 %v153, 7
    %v155 = vsub.s32 0, %v154
    %v156 = vrot.slane %v152, %v155
    %v157 = vmul.f32 %v25, %v156
    %v158 = vmul.f32 %v26, %v156
    %v159 = vadd.f32 %v150, %v157
    %v160 = vadd.f32 %v151, %v158
    %v161 = vld [vmem:[%s129 + $0x1] sm:$0xff]
    %v162 = vld [vmem:[%s129 + $0x9] sm:$0xff]
    %v163 = vld [vmem:[%s4 + $0x5] sm:$0x1]
    %v164 = vlaneseq
    %v165 = vshrl.u32 %v164, 7
    %v166 = vsub.s32 0, %v165
    %v167 = vrot.slane %v163, %v166
    %v168 = vmul.f32 %v161, %v167
    %v169 = vmul.f32 %v162, %v167
    %v170 = vadd.f32 %v159, %v168
    %v171 = vadd.f32 %v160, %v169
    %v172 = vld [vmem:[%s0 + $0x2] sm:$0xff]
    %v173 = vld [vmem:[%s0 + $0xa] sm:$0xff]
    %v174 = vld [vmem:[%s4 + $0x6] sm:$0x1]
    %v175 = vlaneseq
    %v176 = vshrl.u32 %v175, 7
    %v177 = vsub.s32 0, %v176
    %v178 = vrot.slane %v174, %v177
    %v179 = vmul.f32 %v172, %v178
    %v180 = vmul.f32 %v173, %v178
    %v181 = vadd.f32 %v170, %v179
    %v182 = vadd.f32 %v171, %v180
    %v183 = vld [vmem:[%s24 + $0x2] sm:$0xff]
    %v184 = vld [vmem:[%s24 + $0xa] sm:$0xff]
    %v185 = vld [vmem:[%s4 + $0x7] sm:$0x1]
    %v186 = vlaneseq
    %v187 = vshrl.u32 %v186, 7
    %v188 = vsub.s32 0, %v187
    %v189 = vrot.slane %v185, %v188
    %v190 = vmul.f32 %v183, %v189
    %v191 = vmul.f32 %v184, %v189
    %v192 = vadd.f32 %v181, %v190
    %v193 = vadd.f32 %v182, %v191
    %v194 = vld [vmem:[%s129 + $0x2] sm:$0xff]
    %v195 = vld [vmem:[%s129 + $0xa] sm:$0xff]
    %v196 = vld [vmem:[%s4 + $0x8] sm:$0x1]
    %v197 = vlaneseq
    %v198 = vshrl.u32 %v197, 7
    %v199 = vsub.s32 0, %v198
    %v200 = vrot.slane %v196, %v199
    %v201 = vmul.f32 %v194, %v200
    %v202 = vmul.f32 %v195, %v200
    %v203 = vadd.f32 %v192, %v201
    %v204 = vadd.f32 %v193, %v202
    %v205 = vlaneseq
    %v206 = vshrl.u32 %v205, 7
    %v207 = vsub.s32 0, %v206
    %v208 = vrot.slane %v108, %v207
    %v209 = vmul.f32 %v203, %v208
    %v210 = vmul.f32 %v204, %v208
    %s211 = scalar_lea.vmem %s0, 72
    %v212 = vld [vmem:[%s211] sm:$0xff]
    %v213 = vld [vmem:[%s211 + $0x8] sm:$0xff]
    %v214 = vld [vmem:[%s4 + $0x9] sm:$0x1]
    %v215 = vlaneseq
    %v216 = vshrl.u32 %v215, 7
    %v217 = vsub.s32 0, %v216
    %v218 = vrot.slane %v214, %v217
    %v219 = vmul.f32 %v212, %v218
    %v220 = vmul.f32 %v213, %v218
    %v221 = vld [vmem:[%s41] sm:$0xff]
    %v222 = vld [vmem:[%s41 + $0x8] sm:$0xff]
    %v223 = vld [vmem:[%s4 + $0xa] sm:$0x1]
    %v224 = vlaneseq
    %v225 = vshrl.u32 %v224, 7
    %v226 = vsub.s32 0, %v225
    %v227 = vrot.slane %v223, %v226
    %v228 = vmul.f32 %v221, %v227
    %v229 = vmul.f32 %v222, %v227
    %v230 = vadd.f32 %v219, %v228
    %v231 = vadd.f32 %v220, %v229
    %s232 = scalar_lea.vmem %s0, 120
    %v233 = vld [vmem:[%s232] sm:$0xff]
    %v234 = vld [vmem:[%s232 + $0x8] sm:$0xff]
    %v235 = vld [vmem:[%s4 + $0xb] sm:$0x1]
    %v236 = vlaneseq
    %v237 = vshrl.u32 %v236, 7
    %v238 = vsub.s32 0, %v237
    %v239 = vrot.slane %v235, %v238
    %v240 = vmul.f32 %v233, %v239
    %v241 = vmul.f32 %v234, %v239
    %v242 = vadd.f32 %v230, %v240
    %v243 = vadd.f32 %v231, %v241
    %v244 = vld [vmem:[%s211 + $0x1] sm:$0xff]
    %v245 = vld [vmem:[%s211 + $0x9] sm:$0xff]
    %v246 = vld [vmem:[%s4 + $0xc] sm:$0x1]
    %v247 = vlaneseq
    %v248 = vshrl.u32 %v247, 7
    %v249 = vsub.s32 0, %v248
    %v250 = vrot.slane %v246, %v249
    %v251 = vmul.f32 %v244, %v250
    %v252 = vmul.f32 %v245, %v250
    %v253 = vadd.f32 %v242, %v251
    %v254 = vadd.f32 %v243, %v252
    %v255 = vld [vmem:[%s4 + $0xd] sm:$0x1]
    %v256 = vlaneseq
    %v257 = vshrl.u32 %v256, 7
    %v258 = vsub.s32 0, %v257
    %v259 = vrot.slane %v255, %v258
    %v260 = vmul.f32 %v42, %v259
    %v261 = vmul.f32 %v43, %v259
    %v262 = vadd.f32 %v253, %v260
    %v263 = vadd.f32 %v254, %v261
    %v264 = vld [vmem:[%s232 + $0x1] sm:$0xff]
    %v265 = vld [vmem:[%s232 + $0x9] sm:$0xff]
    %v266 = vld [vmem:[%s4 + $0xe] sm:$0x1]
    %v267 = vlaneseq
    %v268 = vshrl.u32 %v267, 7
    %v269 = vsub.s32 0, %v268
    %v270 = vrot.slane %v266, %v269
    %v271 = vmul.f32 %v264, %v270
    %v272 = vmul.f32 %v265, %v270
    %v273 = vadd.f32 %v262, %v271
    %v274 = vadd.f32 %v263, %v272
    %v275 = vld [vmem:[%s211 + $0x2] sm:$0xff]
    %v276 = vld [vmem:[%s211 + $0xa] sm:$0xff]
    %v277 = vld [vmem:[%s4 + $0xf] sm:$0x1]
    %v278 = vlaneseq
    %v279 = vshrl.u32 %v278, 7
    %v280 = vsub.s32 0, %v279
    %v281 = vrot.slane %v277, %v280
    %v282 = vmul.f32 %v275, %v281
    %v283 = vmul.f32 %v276, %v281
    %v284 = vadd.f32 %v273, %v282
    %v285 = vadd.f32 %v274, %v283
    %v286 = vld [vmem:[%s41 + $0x2] sm:$0xff]
    %v287 = vld [vmem:[%s41 + $0xa] sm:$0xff]
    %v288 = vld [vmem:[%s4 + $0x10] sm:$0x1]
    %v289 = vlaneseq
    %v290 = vshrl.u32 %v289, 7
    %v291 = vsub.s32 0, %v290
    %v292 = vrot.slane %v288, %v291
    %v293 = vmul.f32 %v286, %v292
    %v294 = vmul.f32 %v287, %v292
    %v295 = vadd.f32 %v284, %v293
    %v296 = vadd.f32 %v285, %v294
    %v297 = vld [vmem:[%s232 + $0x2] sm:$0xff]
    %v298 = vld [vmem:[%s232 + $0xa] sm:$0xff]
    %v299 = vld [vmem:[%s4 + $0x11] sm:$0x1]
    %v300 = vlaneseq
    %v301 = vshrl.u32 %v300, 7
    %v302 = vsub.s32 0, %v301
    %v303 = vrot.slane %v299, %v302
    %v304 = vmul.f32 %v297, %v303
    %v305 = vmul.f32 %v298, %v303
    %v306 = vadd.f32 %v295, %v304
    %v307 = vadd.f32 %v296, %v305
    %v308 = vlaneseq
    %v309 = vshrl.u32 %v308, 7
    %v310 = vsub.s32 1, %v309
    %v311 = vrot.slane %v108, %v310
    %v312 = vmul.f32 %v306, %v311
    %v313 = vmul.f32 %v307, %v311
    %v314 = vadd.f32 %v209, %v312
    %v315 = vadd.f32 %v210, %v313
    %s316 = scalar_lea.vmem %s0, 144
    %v317 = vld [vmem:[%s316] sm:$0xff]
    %v318 = vld [vmem:[%s316 + $0x8] sm:$0xff]
    %v319 = vld [vmem:[%s4 + $0x12] sm:$0x1]
    %v320 = vlaneseq
    %v321 = vshrl.u32 %v320, 7
    %v322 = vsub.s32 0, %v321
    %v323 = vrot.slane %v319, %v322
    %v324 = vmul.f32 %v317, %v323
    %v325 = vmul.f32 %v318, %v323
    %v326 = vld [vmem:[%s59] sm:$0xff]
    %v327 = vld [vmem:[%s59 + $0x8] sm:$0xff]
    %v328 = vld [vmem:[%s4 + $0x13] sm:$0x1]
    %v329 = vlaneseq
    %v330 = vshrl.u32 %v329, 7
    %v331 = vsub.s32 0, %v330
    %v332 = vrot.slane %v328, %v331
    %v333 = vmul.f32 %v326, %v332
    %v334 = vmul.f32 %v327, %v332
    %v335 = vadd.f32 %v324, %v333
    %v336 = vadd.f32 %v325, %v334
    %s337 = scalar_lea.vmem %s0, 192
    %v338 = vld [vmem:[%s337] sm:$0xff]
    %v339 = vld [vmem:[%s337 + $0x8] sm:$0xff]
    %v340 = vld [vmem:[%s4 + $0x14] sm:$0x1]
    %v341 = vlaneseq
    %v342 = vshrl.u32 %v341, 7
    %v343 = vsub.s32 0, %v342
    %v344 = vrot.slane %v340, %v343
    %v345 = vmul.f32 %v338, %v344
    %v346 = vmul.f32 %v339, %v344
    %v347 = vadd.f32 %v335, %v345
    %v348 = vadd.f32 %v336, %v346
    %v349 = vld [vmem:[%s316 + $0x1] sm:$0xff]
    %v350 = vld [vmem:[%s316 + $0x9] sm:$0xff]
    %v351 = vld [vmem:[%s4 + $0x15] sm:$0x1]
    %v352 = vlaneseq
    %v353 = vshrl.u32 %v352, 7
    %v354 = vsub.s32 0, %v353
    %v355 = vrot.slane %v351, %v354
    %v356 = vmul.f32 %v349, %v355
    %v357 = vmul.f32 %v350, %v355
    %v358 = vadd.f32 %v347, %v356
    %v359 = vadd.f32 %v348, %v357
    %v360 = vld [vmem:[%s4 + $0x16] sm:$0x1]
    %v361 = vlaneseq
    %v362 = vshrl.u32 %v361, 7
    %v363 = vsub.s32 0, %v362
    %v364 = vrot.slane %v360, %v363
    %v365 = vmul.f32 %v60, %v364
    %v366 = vmul.f32 %v61, %v364
    %v367 = vadd.f32 %v358, %v365
    %v368 = vadd.f32 %v359, %v366
    %v369 = vld [vmem:[%s337 + $0x1] sm:$0xff]
    %v370 = vld [vmem:[%s337 + $0x9] sm:$0xff]
    %v371 = vld [vmem:[%s4 + $0x17] sm:$0x1]
    %v372 = vlaneseq
    %v373 = vshrl.u32 %v372, 7
    %v374 = vsub.s32 0, %v373
    %v375 = vrot.slane %v371, %v374
    %v376 = vmul.f32 %v369, %v375
    %v377 = vmul.f32 %v370, %v375
    %v378 = vadd.f32 %v367, %v376
    %v379 = vadd.f32 %v368, %v377
    %v380 = vld [vmem:[%s316 + $0x2] sm:$0xff]
    %v381 = vld [vmem:[%s316 + $0xa] sm:$0xff]
    %v382 = vld [vmem:[%s4 + $0x18] sm:$0x1]
    %v383 = vlaneseq
    %v384 = vshrl.u32 %v383, 7
    %v385 = vsub.s32 0, %v384
    %v386 = vrot.slane %v382, %v385
    %v387 = vmul.f32 %v380, %v386
    %v388 = vmul.f32 %v381, %v386
    %v389 = vadd.f32 %v378, %v387
    %v390 = vadd.f32 %v379, %v388
    %v391 = vld [vmem:[%s59 + $0x2] sm:$0xff]
    %v392 = vld [vmem:[%s59 + $0xa] sm:$0xff]
    %v393 = vld [vmem:[%s4 + $0x19] sm:$0x1]
    %v394 = vlaneseq
    %v395 = vshrl.u32 %v394, 7
    %v396 = vsub.s32 0, %v395
    %v397 = vrot.slane %v393, %v396
    %v398 = vmul.f32 %v391, %v397
    %v399 = vmul.f32 %v392, %v397
    %v400 = vadd.f32 %v389, %v398
    %v401 = vadd.f32 %v390, %v399
    %v402 = vld [vmem:[%s337 + $0x2] sm:$0xff]
    %v403 = vld [vmem:[%s337 + $0xa] sm:$0xff]
    %v404 = vld [vmem:[%s4 + $0x1a] sm:$0x1]
    %v405 = vlaneseq
    %v406 = vshrl.u32 %v405, 7
    %v407 = vsub.s32 0, %v406
    %v408 = vrot.slane %v404, %v407
    %v409 = vmul.f32 %v402, %v408
    %v410 = vmul.f32 %v403, %v408
    %v411 = vadd.f32 %v400, %v409
    %v412 = vadd.f32 %v401, %v410
    %v413 = vlaneseq
    %v414 = vshrl.u32 %v413, 7
    %v415 = vsub.s32 2, %v414
    %v416 = vrot.slane %v108, %v415
    %v417 = vmul.f32 %v411, %v416
    %v418 = vmul.f32 %v412, %v416
    %v419 = vadd.f32 %v314, %v417
    %v420 = vadd.f32 %v315, %v418
    %s421 = scalar_lea.vmem %s0, 216
    %v422 = vld [vmem:[%s421] sm:$0xff]
    %v423 = vld [vmem:[%s421 + $0x8] sm:$0xff]
    %v424 = vld [vmem:[%s4 + $0x1b] sm:$0x1]
    %v425 = vlaneseq
    %v426 = vshrl.u32 %v425, 7
    %v427 = vsub.s32 0, %v426
    %v428 = vrot.slane %v424, %v427
    %v429 = vmul.f32 %v422, %v428
    %v430 = vmul.f32 %v423, %v428
    %v431 = vld [vmem:[%s77] sm:$0xff]
    %v432 = vld [vmem:[%s77 + $0x8] sm:$0xff]
    %v433 = vld [vmem:[%s4 + $0x1c] sm:$0x1]
    %v434 = vlaneseq
    %v435 = vshrl.u32 %v434, 7
    %v436 = vsub.s32 0, %v435
    %v437 = vrot.slane %v433, %v436
    %v438 = vmul.f32 %v431, %v437
    %v439 = vmul.f32 %v432, %v437
    %v440 = vadd.f32 %v429, %v438
    %v441 = vadd.f32 %v430, %v439
    %s442 = scalar_lea.vmem %s0, 264
    %v443 = vld [vmem:[%s442] sm:$0xff]
    %v444 = vld [vmem:[%s442 + $0x8] sm:$0xff]
    %v445 = vld [vmem:[%s4 + $0x1d] sm:$0x1]
    %v446 = vlaneseq
    %v447 = vshrl.u32 %v446, 7
    %v448 = vsub.s32 0, %v447
    %v449 = vrot.slane %v445, %v448
    %v450 = vmul.f32 %v443, %v449
    %v451 = vmul.f32 %v444, %v449
    %v452 = vadd.f32 %v440, %v450
    %v453 = vadd.f32 %v441, %v451
    %v454 = vld [vmem:[%s421 + $0x1] sm:$0xff]
    %v455 = vld [vmem:[%s421 + $0x9] sm:$0xff]
    %v456 = vld [vmem:[%s4 + $0x1e] sm:$0x1]
    %v457 = vlaneseq
    %v458 = vshrl.u32 %v457, 7
    %v459 = vsub.s32 0, %v458
    %v460 = vrot.slane %v456, %v459
    %v461 = vmul.f32 %v454, %v460
    %v462 = vmul.f32 %v455, %v460
    %v463 = vadd.f32 %v452, %v461
    %v464 = vadd.f32 %v453, %v462
    %v465 = vld [vmem:[%s4 + $0x1f] sm:$0x1]
    %v466 = vlaneseq
    %v467 = vshrl.u32 %v466, 7
    %v468 = vsub.s32 0, %v467
    %v469 = vrot.slane %v465, %v468
    %v470 = vmul.f32 %v78, %v469
    %v471 = vmul.f32 %v79, %v469
    %v472 = vadd.f32 %v463, %v470
    %v473 = vadd.f32 %v464, %v471
    %v474 = vld [vmem:[%s442 + $0x1] sm:$0xff]
    %v475 = vld [vmem:[%s442 + $0x9] sm:$0xff]
    %v476 = vld [vmem:[%s4 + $0x20] sm:$0x1]
    %v477 = vlaneseq
    %v478 = vshrl.u32 %v477, 7
    %v479 = vsub.s32 0, %v478
    %v480 = vrot.slane %v476, %v479
    %v481 = vmul.f32 %v474, %v480
    %v482 = vmul.f32 %v475, %v480
    %v483 = vadd.f32 %v472, %v481
    %v484 = vadd.f32 %v473, %v482
    %v485 = vld [vmem:[%s421 + $0x2] sm:$0xff]
    %v486 = vld [vmem:[%s421 + $0xa] sm:$0xff]
    %v487 = vld [vmem:[%s4 + $0x21] sm:$0x1]
    %v488 = vlaneseq
    %v489 = vshrl.u32 %v488, 7
    %v490 = vsub.s32 0, %v489
    %v491 = vrot.slane %v487, %v490
    %v492 = vmul.f32 %v485, %v491
    %v493 = vmul.f32 %v486, %v491
    %v494 = vadd.f32 %v483, %v492
    %v495 = vadd.f32 %v484, %v493
    %v496 = vld [vmem:[%s77 + $0x2] sm:$0xff]
    %v497 = vld [vmem:[%s77 + $0xa] sm:$0xff]
    %v498 = vld [vmem:[%s4 + $0x22] sm:$0x1]
    %v499 = vlaneseq
    %v500 = vshrl.u32 %v499, 7
    %v501 = vsub.s32 0, %v500
    %v502 = vrot.slane %v498, %v501
    %v503 = vmul.f32 %v496, %v502
    %v504 = vmul.f32 %v497, %v502
    %v505 = vadd.f32 %v494, %v503
    %v506 = vadd.f32 %v495, %v504
    %v507 = vld [vmem:[%s442 + $0x2] sm:$0xff]
    %v508 = vld [vmem:[%s442 + $0xa] sm:$0xff]
    %v509 = vld [vmem:[%s4 + $0x23] sm:$0x1]
    %v510 = vlaneseq
    %v511 = vshrl.u32 %v510, 7
    %v512 = vsub.s32 0, %v511
    %v513 = vrot.slane %v509, %v512
    %v514 = vmul.f32 %v507, %v513
    %v515 = vmul.f32 %v508, %v513
    %v516 = vadd.f32 %v505, %v514
    %v517 = vadd.f32 %v506, %v515
    %v518 = vlaneseq
    %v519 = vshrl.u32 %v518, 7
    %v520 = vsub.s32 3, %v519
    %v521 = vrot.slane %v108, %v520
    %v522 = vmul.f32 %v516, %v521
    %v523 = vmul.f32 %v517, %v521
    %v524 = vadd.f32 %v419, %v522
    %v525 = vadd.f32 %v420, %v523
    %v526 = vld [vmem:[%s5] sm:$0x1]
    %v528 = vlaneseq
    %v529 = vshrl.u32 %v528, 7
    %v530 = vsub.s32 0, %v529
    %v531 = vrot.slane %v526, %v530
    %v533 = vadd.f32 %v524, %v531
    %v534 = vadd.f32 %v525, %v531
    %535 = vst [vmem:[#allocation2] sm:$0xff] %v533
    %536 = vst [vmem:[#allocation2 + $0x8] sm:$0xff] %v534
    %s537 = scalar_lea.vmem %s0, 312
    %v538 = vld [vmem:[%s537 + $0x1] sm:$0xff]
    %v539 = vld [vmem:[%s537 + $0x9] sm:$0xff]
    %540 = vadd.xlane.f32.xlu0 %v538
    %v541 = vpop.xlane.xlu0 %540
    %542 = vadd.xlane.f32.xlu0 %v539
    %v543 = vpop.xlane.xlu0 %542
    %v544 = vadd.f32 %v541, %v543
    %v545 = vrot.slane %v544, 4
    %v546 = vadd.f32 %v544, %v545
    %v547 = vrot.slane %v546, 2
    %v548 = vadd.f32 %v546, %v547
    %v549 = vrot.slane %v548, 1
    %v550 = vadd.f32 %v548, %v549
    %v551 = vmul.f32 %v550, 0.00048828125
    %v552 = vld [vmem:[%s1] sm:$0x1]
    %v553 = vmul.f32 %v551, %v552
    %s554 = scalar_lea.vmem %s0, 384
    %v555 = vld [vmem:[%s554 + $0x1] sm:$0xff]
    %v556 = vld [vmem:[%s554 + $0x9] sm:$0xff]
    %557 = vadd.xlane.f32.xlu0 %v555
    %v558 = vpop.xlane.xlu0 %557
    %559 = vadd.xlane.f32.xlu0 %v556
    %v560 = vpop.xlane.xlu0 %559
    %v561 = vadd.f32 %v558, %v560
    %v562 = vrot.slane %v561, 4
    %v563 = vadd.f32 %v561, %v562
    %v564 = vrot.slane %v563, 2
    %v565 = vadd.f32 %v563, %v564
    %v566 = vrot.slane %v565, 1
    %v567 = vadd.f32 %v565, %v566
    %v568 = vmul.f32 %v567, 0.00048828125
    %v569 = vld [vmem:[%s1 + $0x1] sm:$0x1]
    %v570 = vmul.f32 %v568, %v569
    %v571 = vadd.f32 %v553, %v570
    %s572 = scalar_lea.vmem %s0, 456
    %v573 = vld [vmem:[%s572 + $0x1] sm:$0xff]
    %v574 = vld [vmem:[%s572 + $0x9] sm:$0xff]
    %575 = vadd.xlane.f32.xlu0 %v573
    %v576 = vpop.xlane.xlu0 %575
    %577 = vadd.xlane.f32.xlu0 %v574
    %v578 = vpop.xlane.xlu0 %577
    %v579 = vadd.f32 %v576, %v578
    %v580 = vrot.slane %v579, 4
    %v581 = vadd.f32 %v579, %v580
    %v582 = vrot.slane %v581, 2
    %v583 = vadd.f32 %v581, %v582
    %v584 = vrot.slane %v583, 1
    %v585 = vadd.f32 %v583, %v584
    %v586 = vmul.f32 %v585, 0.00048828125
    %v587 = vld [vmem:[%s1 + $0x2] sm:$0x1]
    %v588 = vmul.f32 %v586, %v587
    %v589 = vadd.f32 %v571, %v588
    %s590 = scalar_lea.vmem %s0, 528
    %v591 = vld [vmem:[%s590 + $0x1] sm:$0xff]
    %v592 = vld [vmem:[%s590 + $0x9] sm:$0xff]
    %593 = vadd.xlane.f32.xlu0 %v591
    %v594 = vpop.xlane.xlu0 %593
    %595 = vadd.xlane.f32.xlu0 %v592
    %v596 = vpop.xlane.xlu0 %595
    %v597 = vadd.f32 %v594, %v596
    %v598 = vrot.slane %v597, 4
    %v599 = vadd.f32 %v597, %v598
    %v600 = vrot.slane %v599, 2
    %v601 = vadd.f32 %v599, %v600
    %v602 = vrot.slane %v601, 1
    %v603 = vadd.f32 %v601, %v602
    %v604 = vmul.f32 %v603, 0.00048828125
    %v605 = vld [vmem:[%s1 + $0x3] sm:$0x1]
    %v606 = vmul.f32 %v604, %v605
    %v607 = vadd.f32 %v589, %v606
    %v608 = vld [vmem:[%s2] sm:$0x1]
    %v609 = vadd.f32 %v607, %v608
    %v610 = vmax.f32 %v609, 0.0
    %v611 = vld [vmem:[%s3] sm:$0xf]
    %v612 = vlaneseq
    %v613 = vshrl.u32 %v612, 7
    %v614 = vsub.s32 0, %v613
    %v615 = vrot.slane %v610, %v614
    %v616 = vmul.f32 %v611, %v615
    %v617 = vsel %vm104, %v616, 0.0
    %618 = vadd.xlane.f32.xlu0 %v617
    %v619 = vpop.xlane.xlu0 %618
    %v620 = vadd.f32 %v619, 1.0
    %s621 = scalar_lea.vmem %s0, 288
    %v622 = vld [vmem:[%s621] sm:$0xff]
    %v623 = vld [vmem:[%s621 + $0x8] sm:$0xff]
    %v624 = vld [vmem:[%s4] sm:$0x1]
    %v625 = vlaneseq
    %v626 = vshrl.u32 %v625, 7
    %v627 = vsub.s32 0, %v626
    %v628 = vrot.slane %v624, %v627
    %v629 = vmul.f32 %v622, %v628
    %v630 = vmul.f32 %v623, %v628
    %v631 = vld [vmem:[%s537] sm:$0xff]
    %v632 = vld [vmem:[%s537 + $0x8] sm:$0xff]
    %v633 = vld [vmem:[%s4 + $0x1] sm:$0x1]
    %v634 = vlaneseq
    %v635 = vshrl.u32 %v634, 7
    %v636 = vsub.s32 0, %v635
    %v637 = vrot.slane %v633, %v636
    %v638 = vmul.f32 %v631, %v637
    %v639 = vmul.f32 %v632, %v637
    %v640 = vadd.f32 %v629, %v638
    %v641 = vadd.f32 %v630, %v639
    %s642 = scalar_lea.vmem %s0, 336
    %v643 = vld [vmem:[%s642] sm:$0xff]
    %v644 = vld [vmem:[%s642 + $0x8] sm:$0xff]
    %v645 = vld [vmem:[%s4 + $0x2] sm:$0x1]
    %v646 = vlaneseq
    %v647 = vshrl.u32 %v646, 7
    %v648 = vsub.s32 0, %v647
    %v649 = vrot.slane %v645, %v648
    %v650 = vmul.f32 %v643, %v649
    %v651 = vmul.f32 %v644, %v649
    %v652 = vadd.f32 %v640, %v650
    %v653 = vadd.f32 %v641, %v651
    %v654 = vld [vmem:[%s621 + $0x1] sm:$0xff]
    %v655 = vld [vmem:[%s621 + $0x9] sm:$0xff]
    %v656 = vld [vmem:[%s4 + $0x3] sm:$0x1]
    %v657 = vlaneseq
    %v658 = vshrl.u32 %v657, 7
    %v659 = vsub.s32 0, %v658
    %v660 = vrot.slane %v656, %v659
    %v661 = vmul.f32 %v654, %v660
    %v662 = vmul.f32 %v655, %v660
    %v663 = vadd.f32 %v652, %v661
    %v664 = vadd.f32 %v653, %v662
    %v665 = vld [vmem:[%s4 + $0x4] sm:$0x1]
    %v666 = vlaneseq
    %v667 = vshrl.u32 %v666, 7
    %v668 = vsub.s32 0, %v667
    %v669 = vrot.slane %v665, %v668
    %v670 = vmul.f32 %v538, %v669
    %v671 = vmul.f32 %v539, %v669
    %v672 = vadd.f32 %v663, %v670
    %v673 = vadd.f32 %v664, %v671
    %v674 = vld [vmem:[%s642 + $0x1] sm:$0xff]
    %v675 = vld [vmem:[%s642 + $0x9] sm:$0xff]
    %v676 = vld [vmem:[%s4 + $0x5] sm:$0x1]
    %v677 = vlaneseq
    %v678 = vshrl.u32 %v677, 7
    %v679 = vsub.s32 0, %v678
    %v680 = vrot.slane %v676, %v679
    %v681 = vmul.f32 %v674, %v680
    %v682 = vmul.f32 %v675, %v680
    %v683 = vadd.f32 %v672, %v681
    %v684 = vadd.f32 %v673, %v682
    %v685 = vld [vmem:[%s621 + $0x2] sm:$0xff]
    %v686 = vld [vmem:[%s621 + $0xa] sm:$0xff]
    %v687 = vld [vmem:[%s4 + $0x6] sm:$0x1]
    %v688 = vlaneseq
    %v689 = vshrl.u32 %v688, 7
    %v690 = vsub.s32 0, %v689
    %v691 = vrot.slane %v687, %v690
    %v692 = vmul.f32 %v685, %v691
    %v693 = vmul.f32 %v686, %v691
    %v694 = vadd.f32 %v683, %v692
    %v695 = vadd.f32 %v684, %v693
    %v696 = vld [vmem:[%s537 + $0x2] sm:$0xff]
    %v697 = vld [vmem:[%s537 + $0xa] sm:$0xff]
    %v698 = vld [vmem:[%s4 + $0x7] sm:$0x1]
    %v699 = vlaneseq
    %v700 = vshrl.u32 %v699, 7
    %v701 = vsub.s32 0, %v700
    %v702 = vrot.slane %v698, %v701
    %v703 = vmul.f32 %v696, %v702
    %v704 = vmul.f32 %v697, %v702
    %v705 = vadd.f32 %v694, %v703
    %v706 = vadd.f32 %v695, %v704
    %v707 = vld [vmem:[%s642 + $0x2] sm:$0xff]
    %v708 = vld [vmem:[%s642 + $0xa] sm:$0xff]
    %v709 = vld [vmem:[%s4 + $0x8] sm:$0x1]
    %v710 = vlaneseq
    %v711 = vshrl.u32 %v710, 7
    %v712 = vsub.s32 0, %v711
    %v713 = vrot.slane %v709, %v712
    %v714 = vmul.f32 %v707, %v713
    %v715 = vmul.f32 %v708, %v713
    %v716 = vadd.f32 %v705, %v714
    %v717 = vadd.f32 %v706, %v715
    %v718 = vlaneseq
    %v719 = vshrl.u32 %v718, 7
    %v720 = vsub.s32 0, %v719
    %v721 = vrot.slane %v620, %v720
    %v722 = vmul.f32 %v716, %v721
    %v723 = vmul.f32 %v717, %v721
    %s724 = scalar_lea.vmem %s0, 360
    %v725 = vld [vmem:[%s724] sm:$0xff]
    %v726 = vld [vmem:[%s724 + $0x8] sm:$0xff]
    %v727 = vld [vmem:[%s4 + $0x9] sm:$0x1]
    %v728 = vlaneseq
    %v729 = vshrl.u32 %v728, 7
    %v730 = vsub.s32 0, %v729
    %v731 = vrot.slane %v727, %v730
    %v732 = vmul.f32 %v725, %v731
    %v733 = vmul.f32 %v726, %v731
    %v734 = vld [vmem:[%s554] sm:$0xff]
    %v735 = vld [vmem:[%s554 + $0x8] sm:$0xff]
    %v736 = vld [vmem:[%s4 + $0xa] sm:$0x1]
    %v737 = vlaneseq
    %v738 = vshrl.u32 %v737, 7
    %v739 = vsub.s32 0, %v738
    %v740 = vrot.slane %v736, %v739
    %v741 = vmul.f32 %v734, %v740
    %v742 = vmul.f32 %v735, %v740
    %v743 = vadd.f32 %v732, %v741
    %v744 = vadd.f32 %v733, %v742
    %s745 = scalar_lea.vmem %s0, 408
    %v746 = vld [vmem:[%s745] sm:$0xff]
    %v747 = vld [vmem:[%s745 + $0x8] sm:$0xff]
    %v748 = vld [vmem:[%s4 + $0xb] sm:$0x1]
    %v749 = vlaneseq
    %v750 = vshrl.u32 %v749, 7
    %v751 = vsub.s32 0, %v750
    %v752 = vrot.slane %v748, %v751
    %v753 = vmul.f32 %v746, %v752
    %v754 = vmul.f32 %v747, %v752
    %v755 = vadd.f32 %v743, %v753
    %v756 = vadd.f32 %v744, %v754
    %v757 = vld [vmem:[%s724 + $0x1] sm:$0xff]
    %v758 = vld [vmem:[%s724 + $0x9] sm:$0xff]
    %v759 = vld [vmem:[%s4 + $0xc] sm:$0x1]
    %v760 = vlaneseq
    %v761 = vshrl.u32 %v760, 7
    %v762 = vsub.s32 0, %v761
    %v763 = vrot.slane %v759, %v762
    %v764 = vmul.f32 %v757, %v763
    %v765 = vmul.f32 %v758, %v763
    %v766 = vadd.f32 %v755, %v764
    %v767 = vadd.f32 %v756, %v765
    %v768 = vld [vmem:[%s4 + $0xd] sm:$0x1]
    %v769 = vlaneseq
    %v770 = vshrl.u32 %v769, 7
    %v771 = vsub.s32 0, %v770
    %v772 = vrot.slane %v768, %v771
    %v773 = vmul.f32 %v555, %v772
    %v774 = vmul.f32 %v556, %v772
    %v775 = vadd.f32 %v766, %v773
    %v776 = vadd.f32 %v767, %v774
    %v777 = vld [vmem:[%s745 + $0x1] sm:$0xff]
    %v778 = vld [vmem:[%s745 + $0x9] sm:$0xff]
    %v779 = vld [vmem:[%s4 + $0xe] sm:$0x1]
    %v780 = vlaneseq
    %v781 = vshrl.u32 %v780, 7
    %v782 = vsub.s32 0, %v781
    %v783 = vrot.slane %v779, %v782
    %v784 = vmul.f32 %v777, %v783
    %v785 = vmul.f32 %v778, %v783
    %v786 = vadd.f32 %v775, %v784
    %v787 = vadd.f32 %v776, %v785
    %v788 = vld [vmem:[%s724 + $0x2] sm:$0xff]
    %v789 = vld [vmem:[%s724 + $0xa] sm:$0xff]
    %v790 = vld [vmem:[%s4 + $0xf] sm:$0x1]
    %v791 = vlaneseq
    %v792 = vshrl.u32 %v791, 7
    %v793 = vsub.s32 0, %v792
    %v794 = vrot.slane %v790, %v793
    %v795 = vmul.f32 %v788, %v794
    %v796 = vmul.f32 %v789, %v794
    %v797 = vadd.f32 %v786, %v795
    %v798 = vadd.f32 %v787, %v796
    %v799 = vld [vmem:[%s554 + $0x2] sm:$0xff]
    %v800 = vld [vmem:[%s554 + $0xa] sm:$0xff]
    %v801 = vld [vmem:[%s4 + $0x10] sm:$0x1]
    %v802 = vlaneseq
    %v803 = vshrl.u32 %v802, 7
    %v804 = vsub.s32 0, %v803
    %v805 = vrot.slane %v801, %v804
    %v806 = vmul.f32 %v799, %v805
    %v807 = vmul.f32 %v800, %v805
    %v808 = vadd.f32 %v797, %v806
    %v809 = vadd.f32 %v798, %v807
    %v810 = vld [vmem:[%s745 + $0x2] sm:$0xff]
    %v811 = vld [vmem:[%s745 + $0xa] sm:$0xff]
    %v812 = vld [vmem:[%s4 + $0x11] sm:$0x1]
    %v813 = vlaneseq
    %v814 = vshrl.u32 %v813, 7
    %v815 = vsub.s32 0, %v814
    %v816 = vrot.slane %v812, %v815
    %v817 = vmul.f32 %v810, %v816
    %v818 = vmul.f32 %v811, %v816
    %v819 = vadd.f32 %v808, %v817
    %v820 = vadd.f32 %v809, %v818
    %v821 = vlaneseq
    %v822 = vshrl.u32 %v821, 7
    %v823 = vsub.s32 1, %v822
    %v824 = vrot.slane %v620, %v823
    %v825 = vmul.f32 %v819, %v824
    %v826 = vmul.f32 %v820, %v824
    %v827 = vadd.f32 %v722, %v825
    %v828 = vadd.f32 %v723, %v826
    %s829 = scalar_lea.vmem %s0, 432
    %v830 = vld [vmem:[%s829] sm:$0xff]
    %v831 = vld [vmem:[%s829 + $0x8] sm:$0xff]
    %v832 = vld [vmem:[%s4 + $0x12] sm:$0x1]
    %v833 = vlaneseq
    %v834 = vshrl.u32 %v833, 7
    %v835 = vsub.s32 0, %v834
    %v836 = vrot.slane %v832, %v835
    %v837 = vmul.f32 %v830, %v836
    %v838 = vmul.f32 %v831, %v836
    %v839 = vld [vmem:[%s572] sm:$0xff]
    %v840 = vld [vmem:[%s572 + $0x8] sm:$0xff]
    %v841 = vld [vmem:[%s4 + $0x13] sm:$0x1]
    %v842 = vlaneseq
    %v843 = vshrl.u32 %v842, 7
    %v844 = vsub.s32 0, %v843
    %v845 = vrot.slane %v841, %v844
    %v846 = vmul.f32 %v839, %v845
    %v847 = vmul.f32 %v840, %v845
    %v848 = vadd.f32 %v837, %v846
    %v849 = vadd.f32 %v838, %v847
    %s850 = scalar_lea.vmem %s0, 480
    %v851 = vld [vmem:[%s850] sm:$0xff]
    %v852 = vld [vmem:[%s850 + $0x8] sm:$0xff]
    %v853 = vld [vmem:[%s4 + $0x14] sm:$0x1]
    %v854 = vlaneseq
    %v855 = vshrl.u32 %v854, 7
    %v856 = vsub.s32 0, %v855
    %v857 = vrot.slane %v853, %v856
    %v858 = vmul.f32 %v851, %v857
    %v859 = vmul.f32 %v852, %v857
    %v860 = vadd.f32 %v848, %v858
    %v861 = vadd.f32 %v849, %v859
    %v862 = vld [vmem:[%s829 + $0x1] sm:$0xff]
    %v863 = vld [vmem:[%s829 + $0x9] sm:$0xff]
    %v864 = vld [vmem:[%s4 + $0x15] sm:$0x1]
    %v865 = vlaneseq
    %v866 = vshrl.u32 %v865, 7
    %v867 = vsub.s32 0, %v866
    %v868 = vrot.slane %v864, %v867
    %v869 = vmul.f32 %v862, %v868
    %v870 = vmul.f32 %v863, %v868
    %v871 = vadd.f32 %v860, %v869
    %v872 = vadd.f32 %v861, %v870
    %v873 = vld [vmem:[%s4 + $0x16] sm:$0x1]
    %v874 = vlaneseq
    %v875 = vshrl.u32 %v874, 7
    %v876 = vsub.s32 0, %v875
    %v877 = vrot.slane %v873, %v876
    %v878 = vmul.f32 %v573, %v877
    %v879 = vmul.f32 %v574, %v877
    %v880 = vadd.f32 %v871, %v878
    %v881 = vadd.f32 %v872, %v879
    %v882 = vld [vmem:[%s850 + $0x1] sm:$0xff]
    %v883 = vld [vmem:[%s850 + $0x9] sm:$0xff]
    %v884 = vld [vmem:[%s4 + $0x17] sm:$0x1]
    %v885 = vlaneseq
    %v886 = vshrl.u32 %v885, 7
    %v887 = vsub.s32 0, %v886
    %v888 = vrot.slane %v884, %v887
    %v889 = vmul.f32 %v882, %v888
    %v890 = vmul.f32 %v883, %v888
    %v891 = vadd.f32 %v880, %v889
    %v892 = vadd.f32 %v881, %v890
    %v893 = vld [vmem:[%s829 + $0x2] sm:$0xff]
    %v894 = vld [vmem:[%s829 + $0xa] sm:$0xff]
    %v895 = vld [vmem:[%s4 + $0x18] sm:$0x1]
    %v896 = vlaneseq
    %v897 = vshrl.u32 %v896, 7
    %v898 = vsub.s32 0, %v897
    %v899 = vrot.slane %v895, %v898
    %v900 = vmul.f32 %v893, %v899
    %v901 = vmul.f32 %v894, %v899
    %v902 = vadd.f32 %v891, %v900
    %v903 = vadd.f32 %v892, %v901
    %v904 = vld [vmem:[%s572 + $0x2] sm:$0xff]
    %v905 = vld [vmem:[%s572 + $0xa] sm:$0xff]
    %v906 = vld [vmem:[%s4 + $0x19] sm:$0x1]
    %v907 = vlaneseq
    %v908 = vshrl.u32 %v907, 7
    %v909 = vsub.s32 0, %v908
    %v910 = vrot.slane %v906, %v909
    %v911 = vmul.f32 %v904, %v910
    %v912 = vmul.f32 %v905, %v910
    %v913 = vadd.f32 %v902, %v911
    %v914 = vadd.f32 %v903, %v912
    %v915 = vld [vmem:[%s850 + $0x2] sm:$0xff]
    %v916 = vld [vmem:[%s850 + $0xa] sm:$0xff]
    %v917 = vld [vmem:[%s4 + $0x1a] sm:$0x1]
    %v918 = vlaneseq
    %v919 = vshrl.u32 %v918, 7
    %v920 = vsub.s32 0, %v919
    %v921 = vrot.slane %v917, %v920
    %v922 = vmul.f32 %v915, %v921
    %v923 = vmul.f32 %v916, %v921
    %v924 = vadd.f32 %v913, %v922
    %v925 = vadd.f32 %v914, %v923
    %v926 = vlaneseq
    %v927 = vshrl.u32 %v926, 7
    %v928 = vsub.s32 2, %v927
    %v929 = vrot.slane %v620, %v928
    %v930 = vmul.f32 %v924, %v929
    %v931 = vmul.f32 %v925, %v929
    %v932 = vadd.f32 %v827, %v930
    %v933 = vadd.f32 %v828, %v931
    %s934 = scalar_lea.vmem %s0, 504
    %v935 = vld [vmem:[%s934] sm:$0xff]
    %v936 = vld [vmem:[%s934 + $0x8] sm:$0xff]
    %v937 = vld [vmem:[%s4 + $0x1b] sm:$0x1]
    %v938 = vlaneseq
    %v939 = vshrl.u32 %v938, 7
    %v940 = vsub.s32 0, %v939
    %v941 = vrot.slane %v937, %v940
    %v942 = vmul.f32 %v935, %v941
    %v943 = vmul.f32 %v936, %v941
    %v944 = vld [vmem:[%s590] sm:$0xff]
    %v945 = vld [vmem:[%s590 + $0x8] sm:$0xff]
    %v946 = vld [vmem:[%s4 + $0x1c] sm:$0x1]
    %v947 = vlaneseq
    %v948 = vshrl.u32 %v947, 7
    %v949 = vsub.s32 0, %v948
    %v950 = vrot.slane %v946, %v949
    %v951 = vmul.f32 %v944, %v950
    %v952 = vmul.f32 %v945, %v950
    %v953 = vadd.f32 %v942, %v951
    %v954 = vadd.f32 %v943, %v952
    %s955 = scalar_lea.vmem %s0, 552
    %v956 = vld [vmem:[%s955] sm:$0xff]
    %v957 = vld [vmem:[%s955 + $0x8] sm:$0xff]
    %v958 = vld [vmem:[%s4 + $0x1d] sm:$0x1]
    %v959 = vlaneseq
    %v960 = vshrl.u32 %v959, 7
    %v961 = vsub.s32 0, %v960
    %v962 = vrot.slane %v958, %v961
    %v963 = vmul.f32 %v956, %v962
    %v964 = vmul.f32 %v957, %v962
    %v965 = vadd.f32 %v953, %v963
    %v966 = vadd.f32 %v954, %v964
    %v967 = vld [vmem:[%s934 + $0x1] sm:$0xff]
    %v968 = vld [vmem:[%s934 + $0x9] sm:$0xff]
    %v969 = vld [vmem:[%s4 + $0x1e] sm:$0x1]
    %v970 = vlaneseq
    %v971 = vshrl.u32 %v970, 7
    %v972 = vsub.s32 0, %v971
    %v973 = vrot.slane %v969, %v972
    %v974 = vmul.f32 %v967, %v973
    %v975 = vmul.f32 %v968, %v973
    %v976 = vadd.f32 %v965, %v974
    %v977 = vadd.f32 %v966, %v975
    %v978 = vld [vmem:[%s4 + $0x1f] sm:$0x1]
    %v979 = vlaneseq
    %v980 = vshrl.u32 %v979, 7
    %v981 = vsub.s32 0, %v980
    %v982 = vrot.slane %v978, %v981
    %v983 = vmul.f32 %v591, %v982
    %v984 = vmul.f32 %v592, %v982
    %v985 = vadd.f32 %v976, %v983
    %v986 = vadd.f32 %v977, %v984
    %v987 = vld [vmem:[%s955 + $0x1] sm:$0xff]
    %v988 = vld [vmem:[%s955 + $0x9] sm:$0xff]
    %v989 = vld [vmem:[%s4 + $0x20] sm:$0x1]
    %v990 = vlaneseq
    %v991 = vshrl.u32 %v990, 7
    %v992 = vsub.s32 0, %v991
    %v993 = vrot.slane %v989, %v992
    %v994 = vmul.f32 %v987, %v993
    %v995 = vmul.f32 %v988, %v993
    %v996 = vadd.f32 %v985, %v994
    %v997 = vadd.f32 %v986, %v995
    %v998 = vld [vmem:[%s934 + $0x2] sm:$0xff]
    %v999 = vld [vmem:[%s934 + $0xa] sm:$0xff]
    %v1000 = vld [vmem:[%s4 + $0x21] sm:$0x1]
    %v1001 = vlaneseq
    %v1002 = vshrl.u32 %v1001, 7
    %v1003 = vsub.s32 0, %v1002
    %v1004 = vrot.slane %v1000, %v1003
    %v1005 = vmul.f32 %v998, %v1004
    %v1006 = vmul.f32 %v999, %v1004
    %v1007 = vadd.f32 %v996, %v1005
    %v1008 = vadd.f32 %v997, %v1006
    %v1009 = vld [vmem:[%s590 + $0x2] sm:$0xff]
    %v1010 = vld [vmem:[%s590 + $0xa] sm:$0xff]
    %v1011 = vld [vmem:[%s4 + $0x22] sm:$0x1]
    %v1012 = vlaneseq
    %v1013 = vshrl.u32 %v1012, 7
    %v1014 = vsub.s32 0, %v1013
    %v1015 = vrot.slane %v1011, %v1014
    %v1016 = vmul.f32 %v1009, %v1015
    %v1017 = vmul.f32 %v1010, %v1015
    %v1018 = vadd.f32 %v1007, %v1016
    %v1019 = vadd.f32 %v1008, %v1017
    %v1020 = vld [vmem:[%s955 + $0x2] sm:$0xff]
    %v1021 = vld [vmem:[%s955 + $0xa] sm:$0xff]
    %v1022 = vld [vmem:[%s4 + $0x23] sm:$0x1]
    %v1023 = vlaneseq
    %v1024 = vshrl.u32 %v1023, 7
    %v1025 = vsub.s32 0, %v1024
    %v1026 = vrot.slane %v1022, %v1025
    %v1027 = vmul.f32 %v1020, %v1026
    %v1028 = vmul.f32 %v1021, %v1026
    %v1029 = vadd.f32 %v1018, %v1027
    %v1030 = vadd.f32 %v1019, %v1028
    %v1031 = vlaneseq
    %v1032 = vshrl.u32 %v1031, 7
    %v1033 = vsub.s32 3, %v1032
    %v1034 = vrot.slane %v620, %v1033
    %v1035 = vmul.f32 %v1029, %v1034
    %v1036 = vmul.f32 %v1030, %v1034
    %v1037 = vadd.f32 %v932, %v1035
    %v1038 = vadd.f32 %v933, %v1036
    %v1039 = vld [vmem:[%s5] sm:$0x1]
    %v1041 = vlaneseq
    %v1042 = vshrl.u32 %v1041, 7
    %v1043 = vsub.s32 0, %v1042
    %v1044 = vrot.slane %v1039, %v1043
    %v1046 = vadd.f32 %v1037, %v1044
    %v1047 = vadd.f32 %v1038, %v1044
    %s1048 = scalar_lea.vmem [#allocation2], 16
    %1049 = vst [vmem:[%s1048] sm:$0xff] %v1046
    %1050 = vst [vmem:[%s1048 + $0x8] sm:$0xff] %v1047
    // Predicated region
    $region26: #{tpu_custom_call.1} parent=1 // pred_check
      _
    $region27: #{tpu_custom_call.1} parent=1 // pred_check_branch
      %1052 = sbr.rel (0) target = $region29
    $region28: #{tpu_custom_call.1} parent=1 // pred_region
      %s1054 = ssub.s32 512, 512
      %1055 = vsyncadd [#allocation3], %s1054
      %s1056 = sshll.u32 [#allocation2], 4
      %s1057 = int_to_ptr.vmem [resolvable:$true] %s1056
      %1062 = dma.vmem_to_hbm [thread:$0]  %s1057, 512, %s6, [#allocation3], 128, 128, 8
    $region29: #{tpu_custom_call.1} parent=1 // pred_fallthru
      _
    // Predicated region
    $region30: #{tpu_custom_call.1} parent=1 // pred_check
      _
    $region31: #{tpu_custom_call.1} parent=1 // pred_check_branch
      %1064 = sbr.rel (0) target = $region33
    $region32: #{tpu_custom_call.1} parent=1 // pred_region
      %1065 = dma.done [#allocation3], 512
    $region33: #{tpu_custom_call.1} parent=1 // pred_fallthru
      _
    %1066 = vsyncpa [#allocation3], 1

</llo_original>
